<compile_context>
chip_gen: v5e
topology: v5e:2x2
jax: 0.10.0
libtpu: 0.0.40
codegen_flags: <defaults>
</compile_context>

<pallas_src>
import jax
import jax.numpy as jnp
from jax.experimental import pallas as pl

# Problem size (matches the PyTorch module with inp_dim != out_dim, stride=1).
N, H, W = 2, 16, 16
CIN, COUT = 4, 8
EPS = 1e-5                       # nn.BatchNorm2d default eps
L_IN = N * W * CIN               # 128 lanes  (input slab width)
L_OUT = N * W * COUT             # 256 lanes  (output slab width)


# --------------------------------------------------------------------------
# Host-side parameter repacking (weights -> matmul operands).
# --------------------------------------------------------------------------
def _width_band_3x3(w_hwio, width):
    """w_hwio: (3, 3, c_in, c_out).  Returns (3, width*c_in, width*c_out) banded
    matrices implementing the kx (width) taps of a stride-1 'SAME' 3x3 conv."""
    _, _, c_in, c_out = w_hwio.shape
    xi = jnp.arange(width)[:, None, None]
    xo = jnp.arange(width)[None, :, None]
    kx = jnp.arange(3)[None, None, :]
    sel = (xi == xo + kx - 1).astype(w_hwio.dtype)              # (W, W, 3)
    band = jnp.einsum('kqab,ioq->kiaob', w_hwio, sel)           # (3, W, ci, W, co)
    return band.reshape(3, width * c_in, width * c_out)


def _width_band_1x1(w_io, width):
    """w_io: (c_in, c_out) -> (width*c_in, width*c_out) block-diagonal matrix."""
    c_in, c_out = w_io.shape
    eye = jnp.eye(width, dtype=w_io.dtype)
    return jnp.einsum('ab,io->iaob', w_io, eye).reshape(width * c_in, width * c_out)


def _batch_blockdiag(b, n):
    """(..., r, c) -> (..., n*r, n*c): same per-image matrix for each image."""
    eye = jnp.eye(n, dtype=b.dtype)
    out = jnp.einsum('...ab,nm->...namb', b, eye)
    lead = b.shape[:-2]
    return out.reshape(*lead, n * b.shape[-2], n * b.shape[-1])


def _height_shift_matrices(height):
    """(3, H, H): SH[ky][y, y'] = 1 iff y' == y + ky - 1 (zero pad at borders)."""
    ky = jnp.arange(3)[:, None, None]
    y = jnp.arange(height)[None, :, None]
    ys = jnp.arange(height)[None, None, :]
    return (ys == y + ky - 1).astype(jnp.float32)


# --------------------------------------------------------------------------
# Pallas kernel
# --------------------------------------------------------------------------
def residual_kernel(x_ref, sh_ref, b1_ref, b2_ref, bs_ref, p_ref, bnl_ref, out_ref):
    f32 = jnp.float32
    x = x_ref[...]            # (H, L_IN)   input slab
    p = p_ref[...]            # (L_OUT, L_OUT) channel projector
    bnl = bnl_ref[...]        # (6, L_OUT)  [g1, b1, g2, b2, gs, bs] lane rows
    inv_npix = 1.0 / float(N * H * W)

    def conv(inp, band_ref):
        # out = sum_ky  SH[ky] @ (inp @ band[ky])
        # ky taps (height, with zero pad) on the left; kx taps + channel mixing
        # (with zero pad) folded into the banded matrix on the right.  All MXU.
        acc = None
        for ky in range(3):
            t = jnp.dot(inp, band_ref[ky], preferred_element_type=f32)   # (H, L)
            t = jnp.dot(sh_ref[ky], t, preferred_element_type=f32)       # (H, L)
            acc = t if acc is None else acc + t
        return acc

    def batch_norm(acc, gamma_l, beta_l):
        # Training-mode BN with biased batch variance.  Sublane reduction over
        # height, then one matmul with P reduces over the (batch, width) lane
        # groups and re-broadcasts the per-channel value to every lane.
        row_sum = jnp.sum(acc, axis=0, keepdims=True)                      # (1, L)
        mean_l = jnp.dot(row_sum, p, preferred_element_type=f32) * inv_npix
        d = acc - mean_l
        sq_sum = jnp.sum(d * d, axis=0, keepdims=True)
        var_l = jnp.dot(sq_sum, p, preferred_element_type=f32) * inv_npix
        return d * (gamma_l * jax.lax.rsqrt(var_l + EPS)) + beta_l

    # conv1 -> bn1 -> relu
    r1 = jnp.maximum(batch_norm(conv(x, b1_ref), bnl[0:1], bnl[1:2]), 0.0)
    # conv2 -> bn2
    y2 = batch_norm(conv(r1, b2_ref), bnl[2:3], bnl[3:4])
    # skip: 1x1 conv -> bn
    ys = batch_norm(jnp.dot(x, bs_ref[...], preferred_element_type=f32),
                    bnl[4:5], bnl[5:6])
    # residual add -> relu, stored as one lane-dense (16, 256) slab
    out_ref[...] = jnp.maximum(y2 + ys, 0.0).astype(out_ref.dtype)


# --------------------------------------------------------------------------
# Wrapper (NCHW in / NCHW out, PyTorch convention)
# --------------------------------------------------------------------------
def residual_forward(x_nchw, params):
    w1, g1, b1, w2, g2, b2, ws, gs, bs = params
    x = x_nchw.astype(jnp.float32)

    # (N, C, H, W) -> (H, N, W, C) -> (H, N*W*C): height on sublanes, dense
    # (batch, width, channel) interleave on lanes.
    x2d = jnp.transpose(x, (2, 0, 3, 1)).reshape(H, L_IN)

    # Conv taps as matmul operands (depend only on the weights; in a real net
    # these would be precomputed once, not per call).
    B1 = _batch_blockdiag(_width_band_3x3(w1, W), N)     # (3, L_IN,  L_OUT)
    B2 = _batch_blockdiag(_width_band_3x3(w2, W), N)     # (3, L_OUT, L_OUT)
    Bs = _batch_blockdiag(_width_band_1x1(ws, W), N)     # (L_IN, L_OUT)
    SH = _height_shift_matrices(H)                       # (3, H, H)

    # Channel projector: P[l1, l2] = 1 iff lanes l1, l2 carry the same channel.
    G = jnp.tile(jnp.eye(COUT, dtype=jnp.float32), (N * W, 1))   # (L_OUT, COUT)
    P = G @ G.T                                                   # (L_OUT, L_OUT)

    # BN affine params broadcast to the interleaved lane layout, packed as rows.
    bnl = jnp.tile(jnp.stack([g1, b1, g2, b2, gs, bs]), (1, N * W))   # (6, L_OUT)

    out2d = pl.pallas_call(
        residual_kernel,
        out_shape=jax.ShapeDtypeStruct((H, L_OUT), jnp.float32),
    )(x2d, SH, B1, B2, Bs, P, bnl)

    # (H, N*W*COUT) -> (H, N, W, COUT) -> (N, COUT, H, W)
    return jnp.transpose(out2d.reshape(H, N, W, COUT), (1, 3, 0, 2))


# --------------------------------------------------------------------------
# Pure-JAX reference (lax conv) for the correctness check
# --------------------------------------------------------------------------
def ref_forward_nhwc(x_nhwc, params):
    w1, g1, b1, w2, g2, b2, ws, gs, bs = params

    def bn(x, g, b):
        m = jnp.mean(x, axis=(0, 1, 2), keepdims=True)
        v = jnp.mean((x - m) ** 2, axis=(0, 1, 2), keepdims=True)
        return (x - m) * jax.lax.rsqrt(v + EPS) * g.reshape(1, 1, 1, -1) \
            + b.reshape(1, 1, 1, -1)

    dn = ('NHWC', 'HWIO', 'NHWC')
    c1 = jax.lax.conv_general_dilated(x_nhwc, w1, (1, 1), 'SAME',
                                      dimension_numbers=dn)
    r1 = jax.nn.relu(bn(c1, g1, b1))
    c2 = jax.lax.conv_general_dilated(r1, w2, (1, 1), 'SAME',
                                      dimension_numbers=dn)
    y2 = bn(c2, g2, b2)
    cs = jax.lax.conv_general_dilated(x_nhwc, ws.reshape(1, 1, CIN, COUT),
                                      (1, 1), 'SAME', dimension_numbers=dn)
    ys = bn(cs, gs, bs)
    return jax.nn.relu(y2 + ys)


def make_params(key):
    ks = jax.random.split(key, 5)
    w1 = 0.1 * jax.random.normal(ks[0], (3, 3, CIN, COUT), jnp.float32)   # HWIO
    w2 = 0.1 * jax.random.normal(ks[1], (3, 3, COUT, COUT), jnp.float32)
    ws = 0.1 * jax.random.normal(ks[2], (CIN, COUT), jnp.float32)
    g1 = 1.0 + 0.1 * jax.random.normal(ks[3], (COUT,), jnp.float32)
    g2 = 1.0 + 0.1 * jax.random.normal(ks[4], (COUT,), jnp.float32)
    gs = jnp.ones((COUT,), jnp.float32)
    b1 = jnp.full((COUT,), 0.05, jnp.float32)
    b2 = jnp.full((COUT,), -0.05, jnp.float32)
    bs = jnp.zeros((COUT,), jnp.float32)
    return (w1, g1, b1, w2, g2, b2, ws, gs, bs)


if __name__ == "__main__":
    key = jax.random.PRNGKey(0)
    kx, kp = jax.random.split(key)
    x_nchw = jax.random.normal(kx, (N, CIN, H, W), jnp.float32)   # PyTorch NCHW
    params = make_params(kp)

    fwd = jax.jit(residual_forward)
    out = jax.block_until_ready(fwd(x_nchw, params))
    assert out.shape == (N, COUT, H, W)

    # correctness check against a pure-JAX reference
    x_nhwc = jnp.transpose(x_nchw, (0, 2, 3, 1))
    ref = jnp.transpose(ref_forward_nhwc(x_nhwc, params), (0, 3, 1, 2))
    max_err = float(jnp.max(jnp.abs(out - ref)))
    assert jnp.allclose(out, ref, atol=1e-3, rtol=1e-3), max_err

    print("KERNEL_OK")
</pallas_src>

<mosaic_0001>
module attributes {stable_mosaic.version = 11 : i64} {
  func.func @residual_kernel(%arg0: memref<16x128xf32, #tpu.memory_space<vmem>>, %arg1: memref<3x16x16xf32, #tpu.memory_space<vmem>>, %arg2: memref<3x128x256xf32, #tpu.memory_space<vmem>>, %arg3: memref<3x256x256xf32, #tpu.memory_space<vmem>>, %arg4: memref<128x256xf32, #tpu.memory_space<vmem>>, %arg5: memref<256x256xf32, #tpu.memory_space<vmem>>, %arg6: memref<6x256xf32, #tpu.memory_space<vmem>>, %arg7: memref<16x256xf32, #tpu.memory_space<vmem>>) attributes {dimension_semantics = [], scalar_prefetch = 0 : i64, scratch_operands = 0 : i64, tpu.core_type = #tpu.core_type<tc>} {
    %c0 = arith.constant 0 : index
    %c0_0 = arith.constant 0 : index
    %0 = vector.load %arg0[%c0, %c0_0] : memref<16x128xf32, #tpu.memory_space<vmem>>, vector<16x128xf32>
    %c0_1 = arith.constant 0 : index
    %c0_2 = arith.constant 0 : index
    %1 = vector.load %arg5[%c0_1, %c0_2] : memref<256x256xf32, #tpu.memory_space<vmem>>, vector<256x256xf32>
    %c0_3 = arith.constant 0 : index
    %c0_4 = arith.constant 0 : index
    %2 = vector.load %arg6[%c0_3, %c0_4] : memref<6x256xf32, #tpu.memory_space<vmem>>, vector<6x256xf32>
    %c0_5 = arith.constant 0 : index
    %c0_6 = arith.constant 0 : index
    %c0_7 = arith.constant 0 : index
    %3 = vector.load %arg2[%c0_5, %c0_6, %c0_7] : memref<3x128x256xf32, #tpu.memory_space<vmem>>, vector<1x128x256xf32>
    %4 = vector.shape_cast %3 : vector<1x128x256xf32> to vector<128x256xf32>
    %cst = arith.constant dense<0.000000e+00> : vector<16x256xf32>
    %5 = tpu.matmul %0, %4, %cst {dimension_numbers = #tpu.dot_dimension_numbers<[1], [0], [0], [1], [0, 0, 1, 1], [], []>} : vector<16x128xf32>, vector<128x256xf32>, vector<16x256xf32> -> vector<16x256xf32>
    %c0_8 = arith.constant 0 : index
    %c0_9 = arith.constant 0 : index
    %c0_10 = arith.constant 0 : index
    %6 = vector.load %arg1[%c0_8, %c0_9, %c0_10] : memref<3x16x16xf32, #tpu.memory_space<vmem>>, vector<1x16x16xf32>
    %7 = vector.shape_cast %6 : vector<1x16x16xf32> to vector<16x16xf32>
    %cst_11 = arith.constant dense<0.000000e+00> : vector<16x256xf32>
    %8 = tpu.matmul %7, %5, %cst_11 {dimension_numbers = #tpu.dot_dimension_numbers<[1], [0], [0], [1], [0, 0, 1, 1], [], []>} : vector<16x16xf32>, vector<16x256xf32>, vector<16x256xf32> -> vector<16x256xf32>
    %c1 = arith.constant 1 : index
    %c0_12 = arith.constant 0 : index
    %c0_13 = arith.constant 0 : index
    %9 = vector.load %arg2[%c1, %c0_12, %c0_13] : memref<3x128x256xf32, #tpu.memory_space<vmem>>, vector<1x128x256xf32>
    %10 = vector.shape_cast %9 : vector<1x128x256xf32> to vector<128x256xf32>
    %cst_14 = arith.constant dense<0.000000e+00> : vector<16x256xf32>
    %11 = tpu.matmul %0, %10, %cst_14 {dimension_numbers = #tpu.dot_dimension_numbers<[1], [0], [0], [1], [0, 0, 1, 1], [], []>} : vector<16x128xf32>, vector<128x256xf32>, vector<16x256xf32> -> vector<16x256xf32>
    %c1_15 = arith.constant 1 : index
    %c0_16 = arith.constant 0 : index
    %c0_17 = arith.constant 0 : index
    %12 = vector.load %arg1[%c1_15, %c0_16, %c0_17] : memref<3x16x16xf32, #tpu.memory_space<vmem>>, vector<1x16x16xf32>
    %13 = vector.shape_cast %12 : vector<1x16x16xf32> to vector<16x16xf32>
    %cst_18 = arith.constant dense<0.000000e+00> : vector<16x256xf32>
    %14 = tpu.matmul %13, %11, %cst_18 {dimension_numbers = #tpu.dot_dimension_numbers<[1], [0], [0], [1], [0, 0, 1, 1], [], []>} : vector<16x16xf32>, vector<16x256xf32>, vector<16x256xf32> -> vector<16x256xf32>
    %15 = arith.addf %8, %14 : vector<16x256xf32>
    %c2 = arith.constant 2 : index
    %c0_19 = arith.constant 0 : index
    %c0_20 = arith.constant 0 : index
    %16 = vector.load %arg2[%c2, %c0_19, %c0_20] : memref<3x128x256xf32, #tpu.memory_space<vmem>>, vector<1x128x256xf32>
    %17 = vector.shape_cast %16 : vector<1x128x256xf32> to vector<128x256xf32>
    %cst_21 = arith.constant dense<0.000000e+00> : vector<16x256xf32>
    %18 = tpu.matmul %0, %17, %cst_21 {dimension_numbers = #tpu.dot_dimension_numbers<[1], [0], [0], [1], [0, 0, 1, 1], [], []>} : vector<16x128xf32>, vector<128x256xf32>, vector<16x256xf32> -> vector<16x256xf32>
    %c2_22 = arith.constant 2 : index
    %c0_23 = arith.constant 0 : index
    %c0_24 = arith.constant 0 : index
    %19 = vector.load %arg1[%c2_22, %c0_23, %c0_24] : memref<3x16x16xf32, #tpu.memory_space<vmem>>, vector<1x16x16xf32>
    %20 = vector.shape_cast %19 : vector<1x16x16xf32> to vector<16x16xf32>
    %cst_25 = arith.constant dense<0.000000e+00> : vector<16x256xf32>
    %21 = tpu.matmul %20, %18, %cst_25 {dimension_numbers = #tpu.dot_dimension_numbers<[1], [0], [0], [1], [0, 0, 1, 1], [], []>} : vector<16x16xf32>, vector<16x256xf32>, vector<16x256xf32> -> vector<16x256xf32>
    %22 = arith.addf %15, %21 : vector<16x256xf32>
    %23 = vector.extract_strided_slice %2 {offsets = [0, 0], sizes = [1, 256], strides = [1, 1]} : vector<6x256xf32> to vector<1x256xf32>
    %24 = vector.extract_strided_slice %2 {offsets = [1, 0], sizes = [1, 256], strides = [1, 1]} : vector<6x256xf32> to vector<1x256xf32>
    %cst_26 = arith.constant dense<0.000000e+00> : vector<256xf32>
    %25 = vector.multi_reduction <add>, %22, %cst_26 [0] : vector<16x256xf32> to vector<256xf32>
    %26 = vector.shape_cast %25 : vector<256xf32> to vector<1x256xf32>
    %cst_27 = arith.constant dense<0.000000e+00> : vector<1x256xf32>
    %27 = tpu.matmul %26, %1, %cst_27 {dimension_numbers = #tpu.dot_dimension_numbers<[1], [0], [0], [1], [0, 0, 1, 1], [], []>} : vector<1x256xf32>, vector<256x256xf32>, vector<1x256xf32> -> vector<1x256xf32>
    %cst_28 = arith.constant 0.001953125 : f32
    %28 = vector.broadcast %cst_28 : f32 to vector<1x256xf32>
    %29 = arith.mulf %27, %28 : vector<1x256xf32>
    %30 = vector.broadcast %29 : vector<1x256xf32> to vector<16x256xf32>
    %31 = arith.subf %22, %30 : vector<16x256xf32>
    %32 = arith.mulf %31, %31 : vector<16x256xf32>
    %cst_29 = arith.constant dense<0.000000e+00> : vector<256xf32>
    %33 = vector.multi_reduction <add>, %32, %cst_29 [0] : vector<16x256xf32> to vector<256xf32>
    %34 = vector.shape_cast %33 : vector<256xf32> to vector<1x256xf32>
    %cst_30 = arith.constant dense<0.000000e+00> : vector<1x256xf32>
    %35 = tpu.matmul %34, %1, %cst_30 {dimension_numbers = #tpu.dot_dimension_numbers<[1], [0], [0], [1], [0, 0, 1, 1], [], []>} : vector<1x256xf32>, vector<256x256xf32>, vector<1x256xf32> -> vector<1x256xf32>
    %cst_31 = arith.constant 0.001953125 : f32
    %36 = vector.broadcast %cst_31 : f32 to vector<1x256xf32>
    %37 = arith.mulf %35, %36 : vector<1x256xf32>
    %cst_32 = arith.constant 9.99999974E-6 : f32
    %38 = vector.broadcast %cst_32 : f32 to vector<1x256xf32>
    %39 = arith.addf %37, %38 : vector<1x256xf32>
    %40 = math.rsqrt %39 : vector<1x256xf32>
    %41 = arith.mulf %23, %40 : vector<1x256xf32>
    %42 = vector.broadcast %41 : vector<1x256xf32> to vector<16x256xf32>
    %43 = arith.mulf %31, %42 : vector<16x256xf32>
    %44 = vector.broadcast %24 : vector<1x256xf32> to vector<16x256xf32>
    %45 = arith.addf %43, %44 : vector<16x256xf32>
    %cst_33 = arith.constant 0.000000e+00 : f32
    %46 = vector.broadcast %cst_33 : f32 to vector<16x256xf32>
    %47 = arith.maximumf %45, %46 : vector<16x256xf32>
    %c0_34 = arith.constant 0 : index
    %c0_35 = arith.constant 0 : index
    %c0_36 = arith.constant 0 : index
    %48 = vector.load %arg3[%c0_34, %c0_35, %c0_36] : memref<3x256x256xf32, #tpu.memory_space<vmem>>, vector<1x256x256xf32>
    %49 = vector.shape_cast %48 : vector<1x256x256xf32> to vector<256x256xf32>
    %cst_37 = arith.constant dense<0.000000e+00> : vector<16x256xf32>
    %50 = tpu.matmul %47, %49, %cst_37 {dimension_numbers = #tpu.dot_dimension_numbers<[1], [0], [0], [1], [0, 0, 1, 1], [], []>} : vector<16x256xf32>, vector<256x256xf32>, vector<16x256xf32> -> vector<16x256xf32>
    %c0_38 = arith.constant 0 : index
    %c0_39 = arith.constant 0 : index
    %c0_40 = arith.constant 0 : index
    %51 = vector.load %arg1[%c0_38, %c0_39, %c0_40] : memref<3x16x16xf32, #tpu.memory_space<vmem>>, vector<1x16x16xf32>
    %52 = vector.shape_cast %51 : vector<1x16x16xf32> to vector<16x16xf32>
    %cst_41 = arith.constant dense<0.000000e+00> : vector<16x256xf32>
    %53 = tpu.matmul %52, %50, %cst_41 {dimension_numbers = #tpu.dot_dimension_numbers<[1], [0], [0], [1], [0, 0, 1, 1], [], []>} : vector<16x16xf32>, vector<16x256xf32>, vector<16x256xf32> -> vector<16x256xf32>
    %c1_42 = arith.constant 1 : index
    %c0_43 = arith.constant 0 : index
    %c0_44 = arith.constant 0 : index
    %54 = vector.load %arg3[%c1_42, %c0_43, %c0_44] : memref<3x256x256xf32, #tpu.memory_space<vmem>>, vector<1x256x256xf32>
    %55 = vector.shape_cast %54 : vector<1x256x256xf32> to vector<256x256xf32>
    %cst_45 = arith.constant dense<0.000000e+00> : vector<16x256xf32>
    %56 = tpu.matmul %47, %55, %cst_45 {dimension_numbers = #tpu.dot_dimension_numbers<[1], [0], [0], [1], [0, 0, 1, 1], [], []>} : vector<16x256xf32>, vector<256x256xf32>, vector<16x256xf32> -> vector<16x256xf32>
    %c1_46 = arith.constant 1 : index
    %c0_47 = arith.constant 0 : index
    %c0_48 = arith.constant 0 : index
    %57 = vector.load %arg1[%c1_46, %c0_47, %c0_48] : memref<3x16x16xf32, #tpu.memory_space<vmem>>, vector<1x16x16xf32>
    %58 = vector.shape_cast %57 : vector<1x16x16xf32> to vector<16x16xf32>
    %cst_49 = arith.constant dense<0.000000e+00> : vector<16x256xf32>
    %59 = tpu.matmul %58, %56, %cst_49 {dimension_numbers = #tpu.dot_dimension_numbers<[1], [0], [0], [1], [0, 0, 1, 1], [], []>} : vector<16x16xf32>, vector<16x256xf32>, vector<16x256xf32> -> vector<16x256xf32>
    %60 = arith.addf %53, %59 : vector<16x256xf32>
    %c2_50 = arith.constant 2 : index
    %c0_51 = arith.constant 0 : index
    %c0_52 = arith.constant 0 : index
    %61 = vector.load %arg3[%c2_50, %c0_51, %c0_52] : memref<3x256x256xf32, #tpu.memory_space<vmem>>, vector<1x256x256xf32>
    %62 = vector.shape_cast %61 : vector<1x256x256xf32> to vector<256x256xf32>
    %cst_53 = arith.constant dense<0.000000e+00> : vector<16x256xf32>
    %63 = tpu.matmul %47, %62, %cst_53 {dimension_numbers = #tpu.dot_dimension_numbers<[1], [0], [0], [1], [0, 0, 1, 1], [], []>} : vector<16x256xf32>, vector<256x256xf32>, vector<16x256xf32> -> vector<16x256xf32>
    %c2_54 = arith.constant 2 : index
    %c0_55 = arith.constant 0 : index
    %c0_56 = arith.constant 0 : index
    %64 = vector.load %arg1[%c2_54, %c0_55, %c0_56] : memref<3x16x16xf32, #tpu.memory_space<vmem>>, vector<1x16x16xf32>
    %65 = vector.shape_cast %64 : vector<1x16x16xf32> to vector<16x16xf32>
    %cst_57 = arith.constant dense<0.000000e+00> : vector<16x256xf32>
    %66 = tpu.matmul %65, %63, %cst_57 {dimension_numbers = #tpu.dot_dimension_numbers<[1], [0], [0], [1], [0, 0, 1, 1], [], []>} : vector<16x16xf32>, vector<16x256xf32>, vector<16x256xf32> -> vector<16x256xf32>
    %67 = arith.addf %60, %66 : vector<16x256xf32>
    %68 = vector.extract_strided_slice %2 {offsets = [2, 0], sizes = [1, 256], strides = [1, 1]} : vector<6x256xf32> to vector<1x256xf32>
    %69 = vector.extract_strided_slice %2 {offsets = [3, 0], sizes = [1, 256], strides = [1, 1]} : vector<6x256xf32> to vector<1x256xf32>
    %cst_58 = arith.constant dense<0.000000e+00> : vector<256xf32>
    %70 = vector.multi_reduction <add>, %67, %cst_58 [0] : vector<16x256xf32> to vector<256xf32>
    %71 = vector.shape_cast %70 : vector<256xf32> to vector<1x256xf32>
    %cst_59 = arith.constant dense<0.000000e+00> : vector<1x256xf32>
    %72 = tpu.matmul %71, %1, %cst_59 {dimension_numbers = #tpu.dot_dimension_numbers<[1], [0], [0], [1], [0, 0, 1, 1], [], []>} : vector<1x256xf32>, vector<256x256xf32>, vector<1x256xf32> -> vector<1x256xf32>
    %cst_60 = arith.constant 0.001953125 : f32
    %73 = vector.broadcast %cst_60 : f32 to vector<1x256xf32>
    %74 = arith.mulf %72, %73 : vector<1x256xf32>
    %75 = vector.broadcast %74 : vector<1x256xf32> to vector<16x256xf32>
    %76 = arith.subf %67, %75 : vector<16x256xf32>
    %77 = arith.mulf %76, %76 : vector<16x256xf32>
    %cst_61 = arith.constant dense<0.000000e+00> : vector<256xf32>
    %78 = vector.multi_reduction <add>, %77, %cst_61 [0] : vector<16x256xf32> to vector<256xf32>
    %79 = vector.shape_cast %78 : vector<256xf32> to vector<1x256xf32>
    %cst_62 = arith.constant dense<0.000000e+00> : vector<1x256xf32>
    %80 = tpu.matmul %79, %1, %cst_62 {dimension_numbers = #tpu.dot_dimension_numbers<[1], [0], [0], [1], [0, 0, 1, 1], [], []>} : vector<1x256xf32>, vector<256x256xf32>, vector<1x256xf32> -> vector<1x256xf32>
    %cst_63 = arith.constant 0.001953125 : f32
    %81 = vector.broadcast %cst_63 : f32 to vector<1x256xf32>
    %82 = arith.mulf %80, %81 : vector<1x256xf32>
    %cst_64 = arith.constant 9.99999974E-6 : f32
    %83 = vector.broadcast %cst_64 : f32 to vector<1x256xf32>
    %84 = arith.addf %82, %83 : vector<1x256xf32>
    %85 = math.rsqrt %84 : vector<1x256xf32>
    %86 = arith.mulf %68, %85 : vector<1x256xf32>
    %87 = vector.broadcast %86 : vector<1x256xf32> to vector<16x256xf32>
    %88 = arith.mulf %76, %87 : vector<16x256xf32>
    %89 = vector.broadcast %69 : vector<1x256xf32> to vector<16x256xf32>
    %90 = arith.addf %88, %89 : vector<16x256xf32>
    %c0_65 = arith.constant 0 : index
    %c0_66 = arith.constant 0 : index
    %91 = vector.load %arg4[%c0_65, %c0_66] : memref<128x256xf32, #tpu.memory_space<vmem>>, vector<128x256xf32>
    %cst_67 = arith.constant dense<0.000000e+00> : vector<16x256xf32>
    %92 = tpu.matmul %0, %91, %cst_67 {dimension_numbers = #tpu.dot_dimension_numbers<[1], [0], [0], [1], [0, 0, 1, 1], [], []>} : vector<16x128xf32>, vector<128x256xf32>, vector<16x256xf32> -> vector<16x256xf32>
    %93 = vector.extract_strided_slice %2 {offsets = [4, 0], sizes = [1, 256], strides = [1, 1]} : vector<6x256xf32> to vector<1x256xf32>
    %94 = vector.extract_strided_slice %2 {offsets = [5, 0], sizes = [1, 256], strides = [1, 1]} : vector<6x256xf32> to vector<1x256xf32>
    %cst_68 = arith.constant dense<0.000000e+00> : vector<256xf32>
    %95 = vector.multi_reduction <add>, %92, %cst_68 [0] : vector<16x256xf32> to vector<256xf32>
    %96 = vector.shape_cast %95 : vector<256xf32> to vector<1x256xf32>
    %cst_69 = arith.constant dense<0.000000e+00> : vector<1x256xf32>
    %97 = tpu.matmul %96, %1, %cst_69 {dimension_numbers = #tpu.dot_dimension_numbers<[1], [0], [0], [1], [0, 0, 1, 1], [], []>} : vector<1x256xf32>, vector<256x256xf32>, vector<1x256xf32> -> vector<1x256xf32>
    %cst_70 = arith.constant 0.001953125 : f32
    %98 = vector.broadcast %cst_70 : f32 to vector<1x256xf32>
    %99 = arith.mulf %97, %98 : vector<1x256xf32>
    %100 = vector.broadcast %99 : vector<1x256xf32> to vector<16x256xf32>
    %101 = arith.subf %92, %100 : vector<16x256xf32>
    %102 = arith.mulf %101, %101 : vector<16x256xf32>
    %cst_71 = arith.constant dense<0.000000e+00> : vector<256xf32>
    %103 = vector.multi_reduction <add>, %102, %cst_71 [0] : vector<16x256xf32> to vector<256xf32>
    %104 = vector.shape_cast %103 : vector<256xf32> to vector<1x256xf32>
    %cst_72 = arith.constant dense<0.000000e+00> : vector<1x256xf32>
    %105 = tpu.matmul %104, %1, %cst_72 {dimension_numbers = #tpu.dot_dimension_numbers<[1], [0], [0], [1], [0, 0, 1, 1], [], []>} : vector<1x256xf32>, vector<256x256xf32>, vector<1x256xf32> -> vector<1x256xf32>
    %cst_73 = arith.constant 0.001953125 : f32
    %106 = vector.broadcast %cst_73 : f32 to vector<1x256xf32>
    %107 = arith.mulf %105, %106 : vector<1x256xf32>
    %cst_74 = arith.constant 9.99999974E-6 : f32
    %108 = vector.broadcast %cst_74 : f32 to vector<1x256xf32>
    %109 = arith.addf %107, %108 : vector<1x256xf32>
    %110 = math.rsqrt %109 : vector<1x256xf32>
    %111 = arith.mulf %93, %110 : vector<1x256xf32>
    %112 = vector.broadcast %111 : vector<1x256xf32> to vector<16x256xf32>
    %113 = arith.mulf %101, %112 : vector<16x256xf32>
    %114 = vector.broadcast %94 : vector<1x256xf32> to vector<16x256xf32>
    %115 = arith.addf %113, %114 : vector<16x256xf32>
    %116 = arith.addf %90, %115 : vector<16x256xf32>
    %cst_75 = arith.constant 0.000000e+00 : f32
    %117 = vector.broadcast %cst_75 : f32 to vector<16x256xf32>
    %118 = arith.maximumf %116, %117 : vector<16x256xf32>
    %c0_76 = arith.constant 0 : index
    %c0_77 = arith.constant 0 : index
    %119 = vector.load %arg7[%c0_76, %c0_77] : memref<16x256xf32, #tpu.memory_space<vmem>>, vector<16x256xf32>
    tpu.vector_store %arg7[%c0_76, %c0_77], %118 {strides = array<i32>} : memref<16x256xf32, #tpu.memory_space<vmem>>, vector<16x256xf32>,
    return
  }
}

</mosaic_0001>

<llo_original>
// kernel: tile.19
$region0: #{tile.19}
  %s0 = inlined_call_operand.vmem [shape: f32[6,32,8], index: 0, kind: input, shape index: {}]
  %s1 = inlined_call_operand.vmem [shape: f32[6,256], index: 1, kind: output, shape index: {}]
  %s2 = smov 3
  %v3 = vld [vmem:[%s0] ss:$16 sm:%s2]
  %s4 = smov 12
  %v5 = vld [vmem:[%s0] ss:$16 sm:%s4]
  %vm6 = vcmask 1043458
  %v7 = vsel %vm6, %v5, %v3
  %s8 = smov 48
  %v9 = vld [vmem:[%s0] ss:$16 sm:%s8]
  %vm10 = vcmask 1045508
  %v11 = vsel %vm10, %v9, %v7
  %s12 = smov 192
  %v13 = vld [vmem:[%s0] ss:$16 sm:%s12]
  %vm14 = vcmask 1047558
  %v15 = vsel %vm14, %v13, %v11
  %vm16 = vcmask 64512
  %17 = vst.msk [vmem:[%s1] ss:$8 sm:$0x3] %vm16, %v15
  %s18 = scalar_lea.vmem %s1, 4294967281
  %19 = vst.msk [vmem:[%s18] ss:$8 sm:$0xc] %vm16, %v15
  %s20 = scalar_lea.vmem %s1, 4294967266
  %21 = vst.msk [vmem:[%s20] ss:$8 sm:$0x30] %vm16, %v15
  %s22 = scalar_lea.vmem %s1, 4294967251
  %23 = vst.msk [vmem:[%s22] ss:$8 sm:$0xc0] %vm16, %v15
  %s24 = scalar_lea.vmem %s0, 128
  %s25 = smov 3
  %v26 = vld [vmem:[%s24] ss:$16 sm:%s25]
  %s27 = scalar_lea.vmem %s0, 128
  %s28 = smov 12
  %v29 = vld [vmem:[%s27] ss:$16 sm:%s28]
  %vm30 = vcmask 1043458
  %v31 = vsel %vm30, %v29, %v26
  %vm32 = vcmask 64512
  %s33 = scalar_lea.vmem %s1, 4
  %34 = vst.msk [vmem:[%s33] ss:$8 sm:$0x3] %vm32, %v31
  %s35 = scalar_lea.vmem %s1, 4294967285
  %36 = vst.msk [vmem:[%s35] ss:$8 sm:$0xc] %vm32, %v31
  %s37 = scalar_lea.vmem %s0, 15
  %v38 = vld [vmem:[%s37] sm:$0x1]
  %s39 = scalar_lea.vmem %s0, 46
  %v40 = vld [vmem:[%s39] sm:$0x2]
  %vm41 = vcmask 1041409
  %v42 = vsel %vm41, %v40, %v38
  %s43 = scalar_lea.vmem %s0, 77
  %v44 = vld [vmem:[%s43] sm:$0x4]
  %vm45 = vcmask 1042434
  %v46 = vsel %vm45, %v44, %v42
  %s47 = scalar_lea.vmem %s0, 108
  %v48 = vld [vmem:[%s47] sm:$0x8]
  %vm49 = vcmask 1043459
  %v50 = vsel %vm49, %v48, %v46
  %s51 = scalar_lea.vmem %s0, 139
  %v52 = vld [vmem:[%s51] sm:$0x10]
  %vm53 = vcmask 1044484
  %v54 = vsel %vm53, %v52, %v50
  %s55 = scalar_lea.vmem %s0, 895
  %s56 = smov 96
  %v57 = vld [vmem:[%s55] ss:$-144 sm:%s56]
  %vm58 = vcmask 1046533
  %v59 = vsel %vm58, %v57, %v54
  %s60 = scalar_lea.vmem %s0, 56
  %v61 = vld [vmem:[%s60] sm:$0x80]
  %vm62 = vcmask 1047559
  %v63 = vsel %vm62, %v61, %v59
  %64 = vrot.lane.b32.xlu0 %v63, 120
  %v65 = vpop.permute.xlu0 %64
  %vm66 = vcmask 1048512
  %67 = vst.msk [vmem:[%s1] sm:$0x3f] %vm66, %v65
  %s68 = scalar_lea.vmem %s1, 2
  %69 = vst.msk [vmem:[%s68] sm:$0xc0] %vm66, %v65
  %s70 = scalar_lea.vmem %s0, 95
  %v71 = vld [vmem:[%s70] sm:$0x1]
  %s72 = scalar_lea.vmem %s0, 126
  %v73 = vld [vmem:[%s72] sm:$0x2]
  %vm74 = vcmask 1041409
  %v75 = vsel %vm74, %v73, %v71
  %s76 = scalar_lea.vmem %s0, 157
  %v77 = vld [vmem:[%s76] sm:$0x4]
  %vm78 = vcmask 1042434
  %v79 = vsel %vm78, %v77, %v75
  %s80 = scalar_lea.vmem %s0, 188
  %v81 = vld [vmem:[%s80] sm:$0x8]
  %vm82 = vcmask 1043459
  %v83 = vsel %vm82, %v81, %v79
  %84 = vrot.lane.b32.xlu0 %v83, 120
  %v85 = vpop.permute.xlu0 %84
  %vm86 = vcmask 1048512
  %s87 = scalar_lea.vmem %s1, 10
  %88 = vst.msk [vmem:[%s87] sm:$0xf] %vm86, %v85
  %s89 = scalar_lea.vmem %s0, 14
  %v90 = vld [vmem:[%s89] sm:$0x1]
  %s91 = scalar_lea.vmem %s0, 45
  %v92 = vld [vmem:[%s91] sm:$0x2]
  %vm93 = vcmask 1041409
  %v94 = vsel %vm93, %v92, %v90
  %s95 = scalar_lea.vmem %s0, 76
  %v96 = vld [vmem:[%s95] sm:$0x4]
  %vm97 = vcmask 1042434
  %v98 = vsel %vm97, %v96, %v94
  %s99 = scalar_lea.vmem %s0, 107
  %v100 = vld [vmem:[%s99] sm:$0x8]
  %vm101 = vcmask 1043459
  %v102 = vsel %vm101, %v100, %v98
  %s103 = scalar_lea.vmem %s0, 138
  %v104 = vld [vmem:[%s103] sm:$0x10]
  %vm105 = vcmask 1044484
  %v106 = vsel %vm105, %v104, %v102
  %s107 = scalar_lea.vmem %s0, 894
  %s108 = smov 96
  %v109 = vld [vmem:[%s107] ss:$-144 sm:%s108]
  %vm110 = vcmask 1046533
  %v111 = vsel %vm110, %v109, %v106
  %s112 = scalar_lea.vmem %s0, 55
  %v113 = vld [vmem:[%s112] sm:$0x80]
  %vm114 = vcmask 1047559
  %v115 = vsel %vm114, %v113, %v111
  %116 = vrot.lane.b32.xlu0 %v115, 112
  %v117 = vpop.permute.xlu0 %116
  %vm118 = vcmask 982912
  %119 = vst.msk [vmem:[%s1] sm:$0x3f] %vm118, %v117
  %s120 = scalar_lea.vmem %s1, 2
  %121 = vst.msk [vmem:[%s120] sm:$0xc0] %vm118, %v117
  %s122 = scalar_lea.vmem %s0, 94
  %v123 = vld [vmem:[%s122] sm:$0x1]
  %s124 = scalar_lea.vmem %s0, 125
  %v125 = vld [vmem:[%s124] sm:$0x2]
  %vm126 = vcmask 1041409
  %v127 = vsel %vm126, %v125, %v123
  %s128 = scalar_lea.vmem %s0, 156
  %v129 = vld [vmem:[%s128] sm:$0x4]
  %vm130 = vcmask 1042434
  %v131 = vsel %vm130, %v129, %v127
  %s132 = scalar_lea.vmem %s0, 187
  %v133 = vld [vmem:[%s132] sm:$0x8]
  %vm134 = vcmask 1043459
  %v135 = vsel %vm134, %v133, %v131
  %136 = vrot.lane.b32.xlu0 %v135, 112
  %v137 = vpop.permute.xlu0 %136
  %vm138 = vcmask 982912
  %s139 = scalar_lea.vmem %s1, 10
  %140 = vst.msk [vmem:[%s139] sm:$0xf] %vm138, %v137
  %s141 = scalar_lea.vmem %s0, 13
  %v142 = vld [vmem:[%s141] sm:$0x1]
  %s143 = scalar_lea.vmem %s0, 44
  %v144 = vld [vmem:[%s143] sm:$0x2]
  %vm145 = vcmask 1041409
  %v146 = vsel %vm145, %v144, %v142
  %s147 = scalar_lea.vmem %s0, 75
  %v148 = vld [vmem:[%s147] sm:$0x4]
  %vm149 = vcmask 1042434
  %v150 = vsel %vm149, %v148, %v146
  %s151 = scalar_lea.vmem %s0, 106
  %v152 = vld [vmem:[%s151] sm:$0x8]
  %vm153 = vcmask 1043459
  %v154 = vsel %vm153, %v152, %v150
  %s155 = scalar_lea.vmem %s0, 137
  %v156 = vld [vmem:[%s155] sm:$0x10]
  %vm157 = vcmask 1044484
  %v158 = vsel %vm157, %v156, %v154
  %s159 = scalar_lea.vmem %s0, 893
  %s160 = smov 96
  %v161 = vld [vmem:[%s159] ss:$-144 sm:%s160]
  %vm162 = vcmask 1046533
  %v163 = vsel %vm162, %v161, %v158
  %s164 = scalar_lea.vmem %s0, 54
  %v165 = vld [vmem:[%s164] sm:$0x80]
  %vm166 = vcmask 1047559
  %v167 = vsel %vm166, %v165, %v163
  %168 = vrot.lane.b32.xlu0 %v167, 104
  %v169 = vpop.permute.xlu0 %168
  %vm170 = vcmask 917312
  %171 = vst.msk [vmem:[%s1] sm:$0x3f] %vm170, %v169
  %s172 = scalar_lea.vmem %s1, 2
  %173 = vst.msk [vmem:[%s172] sm:$0xc0] %vm170, %v169
  %s174 = scalar_lea.vmem %s0, 93
  %v175 = vld [vmem:[%s174] sm:$0x1]
  %s176 = scalar_lea.vmem %s0, 124
  %v177 = vld [vmem:[%s176] sm:$0x2]
  %vm178 = vcmask 1041409
  %v179 = vsel %vm178, %v177, %v175
  %s180 = scalar_lea.vmem %s0, 155
  %v181 = vld [vmem:[%s180] sm:$0x4]
  %vm182 = vcmask 1042434
  %v183 = vsel %vm182, %v181, %v179
  %s184 = scalar_lea.vmem %s0, 186
  %v185 = vld [vmem:[%s184] sm:$0x8]
  %vm186 = vcmask 1043459
  %v187 = vsel %vm186, %v185, %v183
  %188 = vrot.lane.b32.xlu0 %v187, 104
  %v189 = vpop.permute.xlu0 %188
  %vm190 = vcmask 917312
  %s191 = scalar_lea.vmem %s1, 10
  %192 = vst.msk [vmem:[%s191] sm:$0xf] %vm190, %v189
  %s193 = scalar_lea.vmem %s0, 12
  %v194 = vld [vmem:[%s193] sm:$0x1]
  %s195 = scalar_lea.vmem %s0, 43
  %v196 = vld [vmem:[%s195] sm:$0x2]
  %vm197 = vcmask 1041409
  %v198 = vsel %vm197, %v196, %v194
  %s199 = scalar_lea.vmem %s0, 74
  %v200 = vld [vmem:[%s199] sm:$0x4]
  %vm201 = vcmask 1042434
  %v202 = vsel %vm201, %v200, %v198
  %s203 = scalar_lea.vmem %s0, 105
  %v204 = vld [vmem:[%s203] sm:$0x8]
  %vm205 = vcmask 1043459
  %v206 = vsel %vm205, %v204, %v202
  %s207 = scalar_lea.vmem %s0, 136
  %v208 = vld [vmem:[%s207] sm:$0x10]
  %vm209 = vcmask 1044484
  %v210 = vsel %vm209, %v208, %v206
  %s211 = scalar_lea.vmem %s0, 892
  %s212 = smov 96
  %v213 = vld [vmem:[%s211] ss:$-144 sm:%s212]
  %vm214 = vcmask 1046533
  %v215 = vsel %vm214, %v213, %v210
  %s216 = scalar_lea.vmem %s0, 53
  %v217 = vld [vmem:[%s216] sm:$0x80]
  %vm218 = vcmask 1047559
  %v219 = vsel %vm218, %v217, %v215
  %220 = vrot.lane.b32.xlu0 %v219, 96
  %v221 = vpop.permute.xlu0 %220
  %vm222 = vcmask 851712
  %223 = vst.msk [vmem:[%s1] sm:$0x3f] %vm222, %v221
  %s224 = scalar_lea.vmem %s1, 2
  %225 = vst.msk [vmem:[%s224] sm:$0xc0] %vm222, %v221
  %s226 = scalar_lea.vmem %s0, 92
  %v227 = vld [vmem:[%s226] sm:$0x1]
  %s228 = scalar_lea.vmem %s0, 123
  %v229 = vld [vmem:[%s228] sm:$0x2]
  %vm230 = vcmask 1041409
  %v231 = vsel %vm230, %v229, %v227
  %s232 = scalar_lea.vmem %s0, 154
  %v233 = vld [vmem:[%s232] sm:$0x4]
  %vm234 = vcmask 1042434
  %v235 = vsel %vm234, %v233, %v231
  %s236 = scalar_lea.vmem %s0, 185
  %v237 = vld [vmem:[%s236] sm:$0x8]
  %vm238 = vcmask 1043459
  %v239 = vsel %vm238, %v237, %v235
  %240 = vrot.lane.b32.xlu0 %v239, 96
  %v241 = vpop.permute.xlu0 %240
  %vm242 = vcmask 851712
  %s243 = scalar_lea.vmem %s1, 10
  %244 = vst.msk [vmem:[%s243] sm:$0xf] %vm242, %v241
  %s245 = scalar_lea.vmem %s0, 11
  %v246 = vld [vmem:[%s245] sm:$0x1]
  %s247 = scalar_lea.vmem %s0, 42
  %v248 = vld [vmem:[%s247] sm:$0x2]
  %vm249 = vcmask 1041409
  %v250 = vsel %vm249, %v248, %v246
  %s251 = scalar_lea.vmem %s0, 73
  %v252 = vld [vmem:[%s251] sm:$0x4]
  %vm253 = vcmask 1042434
  %v254 = vsel %vm253, %v252, %v250
  %s255 = scalar_lea.vmem %s0, 104
  %v256 = vld [vmem:[%s255] sm:$0x8]
  %vm257 = vcmask 1043459
  %v258 = vsel %vm257, %v256, %v254
  %s259 = scalar_lea.vmem %s0, 135
  %v260 = vld [vmem:[%s259] sm:$0x10]
  %vm261 = vcmask 1044484
  %v262 = vsel %vm261, %v260, %v258
  %s263 = scalar_lea.vmem %s0, 891
  %s264 = smov 96
  %v265 = vld [vmem:[%s263] ss:$-144 sm:%s264]
  %vm266 = vcmask 1046533
  %v267 = vsel %vm266, %v265, %v262
  %s268 = scalar_lea.vmem %s0, 52
  %v269 = vld [vmem:[%s268] sm:$0x80]
  %vm270 = vcmask 1047559
  %v271 = vsel %vm270, %v269, %v267
  %272 = vrot.lane.b32.xlu0 %v271, 88
  %v273 = vpop.permute.xlu0 %272
  %vm274 = vcmask 786112
  %275 = vst.msk [vmem:[%s1] sm:$0x3f] %vm274, %v273
  %s276 = scalar_lea.vmem %s1, 2
  %277 = vst.msk [vmem:[%s276] sm:$0xc0] %vm274, %v273
  %s278 = scalar_lea.vmem %s0, 91
  %v279 = vld [vmem:[%s278] sm:$0x1]
  %s280 = scalar_lea.vmem %s0, 122
  %v281 = vld [vmem:[%s280] sm:$0x2]
  %vm282 = vcmask 1041409
  %v283 = vsel %vm282, %v281, %v279
  %s284 = scalar_lea.vmem %s0, 153
  %v285 = vld [vmem:[%s284] sm:$0x4]
  %vm286 = vcmask 1042434
  %v287 = vsel %vm286, %v285, %v283
  %s288 = scalar_lea.vmem %s0, 184
  %v289 = vld [vmem:[%s288] sm:$0x8]
  %vm290 = vcmask 1043459
  %v291 = vsel %vm290, %v289, %v287
  %292 = vrot.lane.b32.xlu0 %v291, 88
  %v293 = vpop.permute.xlu0 %292
  %vm294 = vcmask 786112
  %s295 = scalar_lea.vmem %s1, 10
  %296 = vst.msk [vmem:[%s295] sm:$0xf] %vm294, %v293
  %s297 = scalar_lea.vmem %s0, 10
  %v298 = vld [vmem:[%s297] sm:$0x1]
  %s299 = scalar_lea.vmem %s0, 41
  %v300 = vld [vmem:[%s299] sm:$0x2]
  %vm301 = vcmask 1041409
  %v302 = vsel %vm301, %v300, %v298
  %s303 = scalar_lea.vmem %s0, 72
  %v304 = vld [vmem:[%s303] sm:$0x4]
  %vm305 = vcmask 1042434
  %v306 = vsel %vm305, %v304, %v302
  %s307 = scalar_lea.vmem %s0, 103
  %v308 = vld [vmem:[%s307] sm:$0x8]
  %vm309 = vcmask 1043459
  %v310 = vsel %vm309, %v308, %v306
  %s311 = scalar_lea.vmem %s0, 134
  %v312 = vld [vmem:[%s311] sm:$0x10]
  %vm313 = vcmask 1044484
  %v314 = vsel %vm313, %v312, %v310
  %s315 = scalar_lea.vmem %s0, 890
  %s316 = smov 96
  %v317 = vld [vmem:[%s315] ss:$-144 sm:%s316]
  %vm318 = vcmask 1046533
  %v319 = vsel %vm318, %v317, %v314
  %s320 = scalar_lea.vmem %s0, 51
  %v321 = vld [vmem:[%s320] sm:$0x80]
  %vm322 = vcmask 1047559
  %v323 = vsel %vm322, %v321, %v319
  %324 = vrot.lane.b32.xlu0 %v323, 80
  %v325 = vpop.permute.xlu0 %324
  %vm326 = vcmask 720512
  %327 = vst.msk [vmem:[%s1] sm:$0x3f] %vm326, %v325
  %s328 = scalar_lea.vmem %s1, 2
  %329 = vst.msk [vmem:[%s328] sm:$0xc0] %vm326, %v325
  %s330 = scalar_lea.vmem %s0, 90
  %v331 = vld [vmem:[%s330] sm:$0x1]
  %s332 = scalar_lea.vmem %s0, 121
  %v333 = vld [vmem:[%s332] sm:$0x2]
  %vm334 = vcmask 1041409
  %v335 = vsel %vm334, %v333, %v331
  %s336 = scalar_lea.vmem %s0, 152
  %v337 = vld [vmem:[%s336] sm:$0x4]
  %vm338 = vcmask 1042434
  %v339 = vsel %vm338, %v337, %v335
  %s340 = scalar_lea.vmem %s0, 183
  %v341 = vld [vmem:[%s340] sm:$0x8]
  %vm342 = vcmask 1043459
  %v343 = vsel %vm342, %v341, %v339
  %344 = vrot.lane.b32.xlu0 %v343, 80
  %v345 = vpop.permute.xlu0 %344
  %vm346 = vcmask 720512
  %s347 = scalar_lea.vmem %s1, 10
  %348 = vst.msk [vmem:[%s347] sm:$0xf] %vm346, %v345
  %s349 = scalar_lea.vmem %s0, 9
  %v350 = vld [vmem:[%s349] sm:$0x1]
  %s351 = scalar_lea.vmem %s0, 40
  %v352 = vld [vmem:[%s351] sm:$0x2]
  %vm353 = vcmask 1041409
  %v354 = vsel %vm353, %v352, %v350
  %s355 = scalar_lea.vmem %s0, 71
  %v356 = vld [vmem:[%s355] sm:$0x4]
  %vm357 = vcmask 1042434
  %v358 = vsel %vm357, %v356, %v354
  %s359 = scalar_lea.vmem %s0, 102
  %v360 = vld [vmem:[%s359] sm:$0x8]
  %vm361 = vcmask 1043459
  %v362 = vsel %vm361, %v360, %v358
  %s363 = scalar_lea.vmem %s0, 133
  %v364 = vld [vmem:[%s363] sm:$0x10]
  %vm365 = vcmask 1044484
  %v366 = vsel %vm365, %v364, %v362
  %s367 = scalar_lea.vmem %s0, 889
  %s368 = smov 96
  %v369 = vld [vmem:[%s367] ss:$-144 sm:%s368]
  %vm370 = vcmask 1046533
  %v371 = vsel %vm370, %v369, %v366
  %s372 = scalar_lea.vmem %s0, 50
  %v373 = vld [vmem:[%s372] sm:$0x80]
  %vm374 = vcmask 1047559
  %v375 = vsel %vm374, %v373, %v371
  %376 = vrot.lane.b32.xlu0 %v375, 72
  %v377 = vpop.permute.xlu0 %376
  %vm378 = vcmask 654912
  %379 = vst.msk [vmem:[%s1] sm:$0x3f] %vm378, %v377
  %s380 = scalar_lea.vmem %s1, 2
  %381 = vst.msk [vmem:[%s380] sm:$0xc0] %vm378, %v377
  %s382 = scalar_lea.vmem %s0, 89
  %v383 = vld [vmem:[%s382] sm:$0x1]
  %s384 = scalar_lea.vmem %s0, 120
  %v385 = vld [vmem:[%s384] sm:$0x2]
  %vm386 = vcmask 1041409
  %v387 = vsel %vm386, %v385, %v383
  %s388 = scalar_lea.vmem %s0, 151
  %v389 = vld [vmem:[%s388] sm:$0x4]
  %vm390 = vcmask 1042434
  %v391 = vsel %vm390, %v389, %v387
  %s392 = scalar_lea.vmem %s0, 182
  %v393 = vld [vmem:[%s392] sm:$0x8]
  %vm394 = vcmask 1043459
  %v395 = vsel %vm394, %v393, %v391
  %396 = vrot.lane.b32.xlu0 %v395, 72
  %v397 = vpop.permute.xlu0 %396
  %vm398 = vcmask 654912
  %s399 = scalar_lea.vmem %s1, 10
  %400 = vst.msk [vmem:[%s399] sm:$0xf] %vm398, %v397
  %s401 = scalar_lea.vmem %s0, 8
  %v402 = vld [vmem:[%s401] sm:$0x1]
  %s403 = scalar_lea.vmem %s0, 39
  %v404 = vld [vmem:[%s403] sm:$0x2]
  %vm405 = vcmask 1041409
  %v406 = vsel %vm405, %v404, %v402
  %s407 = scalar_lea.vmem %s0, 70
  %v408 = vld [vmem:[%s407] sm:$0x4]
  %vm409 = vcmask 1042434
  %v410 = vsel %vm409, %v408, %v406
  %s411 = scalar_lea.vmem %s0, 101
  %v412 = vld [vmem:[%s411] sm:$0x8]
  %vm413 = vcmask 1043459
  %v414 = vsel %vm413, %v412, %v410
  %s415 = scalar_lea.vmem %s0, 132
  %v416 = vld [vmem:[%s415] sm:$0x10]
  %vm417 = vcmask 1044484
  %v418 = vsel %vm417, %v416, %v414
  %s419 = scalar_lea.vmem %s0, 888
  %s420 = smov 96
  %v421 = vld [vmem:[%s419] ss:$-144 sm:%s420]
  %vm422 = vcmask 1046533
  %v423 = vsel %vm422, %v421, %v418
  %s424 = scalar_lea.vmem %s0, 49
  %v425 = vld [vmem:[%s424] sm:$0x80]
  %vm426 = vcmask 1047559
  %v427 = vsel %vm426, %v425, %v423
  %428 = vrot.lane.b32.xlu0 %v427, 64
  %v429 = vpop.permute.xlu0 %428
  %vm430 = vcmask 589312
  %431 = vst.msk [vmem:[%s1] sm:$0x3f] %vm430, %v429
  %s432 = scalar_lea.vmem %s1, 2
  %433 = vst.msk [vmem:[%s432] sm:$0xc0] %vm430, %v429
  %s434 = scalar_lea.vmem %s0, 88
  %v435 = vld [vmem:[%s434] sm:$0x1]
  %s436 = scalar_lea.vmem %s0, 119
  %v437 = vld [vmem:[%s436] sm:$0x2]
  %vm438 = vcmask 1041409
  %v439 = vsel %vm438, %v437, %v435
  %s440 = scalar_lea.vmem %s0, 150
  %v441 = vld [vmem:[%s440] sm:$0x4]
  %vm442 = vcmask 1042434
  %v443 = vsel %vm442, %v441, %v439
  %s444 = scalar_lea.vmem %s0, 181
  %v445 = vld [vmem:[%s444] sm:$0x8]
  %vm446 = vcmask 1043459
  %v447 = vsel %vm446, %v445, %v443
  %448 = vrot.lane.b32.xlu0 %v447, 64
  %v449 = vpop.permute.xlu0 %448
  %vm450 = vcmask 589312
  %s451 = scalar_lea.vmem %s1, 10
  %452 = vst.msk [vmem:[%s451] sm:$0xf] %vm450, %v449
  %s453 = scalar_lea.vmem %s0, 7
  %v454 = vld [vmem:[%s453] sm:$0x1]
  %s455 = scalar_lea.vmem %s0, 38
  %v456 = vld [vmem:[%s455] sm:$0x2]
  %vm457 = vcmask 1041409
  %v458 = vsel %vm457, %v456, %v454
  %s459 = scalar_lea.vmem %s0, 69
  %v460 = vld [vmem:[%s459] sm:$0x4]
  %vm461 = vcmask 1042434
  %v462 = vsel %vm461, %v460, %v458
  %s463 = scalar_lea.vmem %s0, 100
  %v464 = vld [vmem:[%s463] sm:$0x8]
  %vm465 = vcmask 1043459
  %v466 = vsel %vm465, %v464, %v462
  %s467 = scalar_lea.vmem %s0, 131
  %v468 = vld [vmem:[%s467] sm:$0x10]
  %vm469 = vcmask 1044484
  %v470 = vsel %vm469, %v468, %v466
  %s471 = scalar_lea.vmem %s0, 887
  %s472 = smov 96
  %v473 = vld [vmem:[%s471] ss:$-144 sm:%s472]
  %vm474 = vcmask 1046533
  %v475 = vsel %vm474, %v473, %v470
  %s476 = scalar_lea.vmem %s0, 48
  %v477 = vld [vmem:[%s476] sm:$0x80]
  %vm478 = vcmask 1047559
  %v479 = vsel %vm478, %v477, %v475
  %480 = vrot.lane.b32.xlu0 %v479, 56
  %v481 = vpop.permute.xlu0 %480
  %vm482 = vcmask 523712
  %483 = vst.msk [vmem:[%s1] sm:$0x3f] %vm482, %v481
  %s484 = scalar_lea.vmem %s1, 2
  %485 = vst.msk [vmem:[%s484] sm:$0xc0] %vm482, %v481
  %s486 = scalar_lea.vmem %s0, 87
  %v487 = vld [vmem:[%s486] sm:$0x1]
  %s488 = scalar_lea.vmem %s0, 118
  %v489 = vld [vmem:[%s488] sm:$0x2]
  %vm490 = vcmask 1041409
  %v491 = vsel %vm490, %v489, %v487
  %s492 = scalar_lea.vmem %s0, 149
  %v493 = vld [vmem:[%s492] sm:$0x4]
  %vm494 = vcmask 1042434
  %v495 = vsel %vm494, %v493, %v491
  %s496 = scalar_lea.vmem %s0, 180
  %v497 = vld [vmem:[%s496] sm:$0x8]
  %vm498 = vcmask 1043459
  %v499 = vsel %vm498, %v497, %v495
  %500 = vrot.lane.b32.xlu0 %v499, 56
  %v501 = vpop.permute.xlu0 %500
  %vm502 = vcmask 523712
  %s503 = scalar_lea.vmem %s1, 10
  %504 = vst.msk [vmem:[%s503] sm:$0xf] %vm502, %v501
  %s505 = scalar_lea.vmem %s0, 6
  %v506 = vld [vmem:[%s505] sm:$0x1]
  %s507 = scalar_lea.vmem %s0, 37
  %v508 = vld [vmem:[%s507] sm:$0x2]
  %vm509 = vcmask 1041409
  %v510 = vsel %vm509, %v508, %v506
  %s511 = scalar_lea.vmem %s0, 68
  %v512 = vld [vmem:[%s511] sm:$0x4]
  %vm513 = vcmask 1042434
  %v514 = vsel %vm513, %v512, %v510
  %s515 = scalar_lea.vmem %s0, 99
  %v516 = vld [vmem:[%s515] sm:$0x8]
  %vm517 = vcmask 1043459
  %v518 = vsel %vm517, %v516, %v514
  %s519 = scalar_lea.vmem %s0, 130
  %v520 = vld [vmem:[%s519] sm:$0x10]
  %vm521 = vcmask 1044484
  %v522 = vsel %vm521, %v520, %v518
  %s523 = scalar_lea.vmem %s0, 886
  %s524 = smov 96
  %v525 = vld [vmem:[%s523] ss:$-144 sm:%s524]
  %vm526 = vcmask 1046533
  %v527 = vsel %vm526, %v525, %v522
  %s528 = scalar_lea.vmem %s0, 47
  %v529 = vld [vmem:[%s528] sm:$0x80]
  %vm530 = vcmask 1047559
  %v531 = vsel %vm530, %v529, %v527
  %532 = vrot.lane.b32.xlu0 %v531, 48
  %v533 = vpop.permute.xlu0 %532
  %vm534 = vcmask 458112
  %535 = vst.msk [vmem:[%s1] sm:$0x3f] %vm534, %v533
  %s536 = scalar_lea.vmem %s1, 2
  %537 = vst.msk [vmem:[%s536] sm:$0xc0] %vm534, %v533
  %s538 = scalar_lea.vmem %s0, 86
  %v539 = vld [vmem:[%s538] sm:$0x1]
  %s540 = scalar_lea.vmem %s0, 117
  %v541 = vld [vmem:[%s540] sm:$0x2]
  %vm542 = vcmask 1041409
  %v543 = vsel %vm542, %v541, %v539
  %s544 = scalar_lea.vmem %s0, 148
  %v545 = vld [vmem:[%s544] sm:$0x4]
  %vm546 = vcmask 1042434
  %v547 = vsel %vm546, %v545, %v543
  %s548 = scalar_lea.vmem %s0, 179
  %v549 = vld [vmem:[%s548] sm:$0x8]
  %vm550 = vcmask 1043459
  %v551 = vsel %vm550, %v549, %v547
  %552 = vrot.lane.b32.xlu0 %v551, 48
  %v553 = vpop.permute.xlu0 %552
  %vm554 = vcmask 458112
  %s555 = scalar_lea.vmem %s1, 10
  %556 = vst.msk [vmem:[%s555] sm:$0xf] %vm554, %v553
  %s557 = scalar_lea.vmem %s0, 5
  %v558 = vld [vmem:[%s557] sm:$0x1]
  %s559 = scalar_lea.vmem %s0, 36
  %v560 = vld [vmem:[%s559] sm:$0x2]
  %vm561 = vcmask 1041409
  %v562 = vsel %vm561, %v560, %v558
  %s563 = scalar_lea.vmem %s0, 67
  %v564 = vld [vmem:[%s563] sm:$0x4]
  %vm565 = vcmask 1042434
  %v566 = vsel %vm565, %v564, %v562
  %s567 = scalar_lea.vmem %s0, 98
  %v568 = vld [vmem:[%s567] sm:$0x8]
  %vm569 = vcmask 1043459
  %v570 = vsel %vm569, %v568, %v566
  %s571 = scalar_lea.vmem %s0, 129
  %v572 = vld [vmem:[%s571] sm:$0x10]
  %vm573 = vcmask 1044484
  %v574 = vsel %vm573, %v572, %v570
  %s575 = scalar_lea.vmem %s0, 885
  %s576 = smov 96
  %v577 = vld [vmem:[%s575] ss:$-144 sm:%s576]
  %vm578 = vcmask 1046533
  %v579 = vsel %vm578, %v577, %v574
  %s580 = scalar_lea.vmem %s0, 46
  %v581 = vld [vmem:[%s580] sm:$0x80]
  %vm582 = vcmask 1047559
  %v583 = vsel %vm582, %v581, %v579
  %584 = vrot.lane.b32.xlu0 %v583, 40
  %v585 = vpop.permute.xlu0 %584
  %vm586 = vcmask 392512
  %587 = vst.msk [vmem:[%s1] sm:$0x3f] %vm586, %v585
  %s588 = scalar_lea.vmem %s1, 2
  %589 = vst.msk [vmem:[%s588] sm:$0xc0] %vm586, %v585
  %s590 = scalar_lea.vmem %s0, 85
  %v591 = vld [vmem:[%s590] sm:$0x1]
  %s592 = scalar_lea.vmem %s0, 116
  %v593 = vld [vmem:[%s592] sm:$0x2]
  %vm594 = vcmask 1041409
  %v595 = vsel %vm594, %v593, %v591
  %s596 = scalar_lea.vmem %s0, 147
  %v597 = vld [vmem:[%s596] sm:$0x4]
  %vm598 = vcmask 1042434
  %v599 = vsel %vm598, %v597, %v595
  %s600 = scalar_lea.vmem %s0, 178
  %v601 = vld [vmem:[%s600] sm:$0x8]
  %vm602 = vcmask 1043459
  %v603 = vsel %vm602, %v601, %v599
  %604 = vrot.lane.b32.xlu0 %v603, 40
  %v605 = vpop.permute.xlu0 %604
  %vm606 = vcmask 392512
  %s607 = scalar_lea.vmem %s1, 10
  %608 = vst.msk [vmem:[%s607] sm:$0xf] %vm606, %v605
  %s609 = scalar_lea.vmem %s0, 4
  %v610 = vld [vmem:[%s609] sm:$0x1]
  %s611 = scalar_lea.vmem %s0, 35
  %v612 = vld [vmem:[%s611] sm:$0x2]
  %vm613 = vcmask 1041409
  %v614 = vsel %vm613, %v612, %v610
  %s615 = scalar_lea.vmem %s0, 66
  %v616 = vld [vmem:[%s615] sm:$0x4]
  %vm617 = vcmask 1042434
  %v618 = vsel %vm617, %v616, %v614
  %s619 = scalar_lea.vmem %s0, 97
  %v620 = vld [vmem:[%s619] sm:$0x8]
  %vm621 = vcmask 1043459
  %v622 = vsel %vm621, %v620, %v618
  %s623 = scalar_lea.vmem %s0, 128
  %v624 = vld [vmem:[%s623] sm:$0x10]
  %vm625 = vcmask 1044484
  %v626 = vsel %vm625, %v624, %v622
  %s627 = scalar_lea.vmem %s0, 884
  %s628 = smov 96
  %v629 = vld [vmem:[%s627] ss:$-144 sm:%s628]
  %vm630 = vcmask 1046533
  %v631 = vsel %vm630, %v629, %v626
  %s632 = scalar_lea.vmem %s0, 45
  %v633 = vld [vmem:[%s632] sm:$0x80]
  %vm634 = vcmask 1047559
  %v635 = vsel %vm634, %v633, %v631
  %636 = vrot.lane.b32.xlu0 %v635, 32
  %v637 = vpop.permute.xlu0 %636
  %vm638 = vcmask 326912
  %639 = vst.msk [vmem:[%s1] sm:$0x3f] %vm638, %v637
  %s640 = scalar_lea.vmem %s1, 2
  %641 = vst.msk [vmem:[%s640] sm:$0xc0] %vm638, %v637
  %s642 = scalar_lea.vmem %s0, 84
  %v643 = vld [vmem:[%s642] sm:$0x1]
  %s644 = scalar_lea.vmem %s0, 115
  %v645 = vld [vmem:[%s644] sm:$0x2]
  %vm646 = vcmask 1041409
  %v647 = vsel %vm646, %v645, %v643
  %s648 = scalar_lea.vmem %s0, 146
  %v649 = vld [vmem:[%s648] sm:$0x4]
  %vm650 = vcmask 1042434
  %v651 = vsel %vm650, %v649, %v647
  %s652 = scalar_lea.vmem %s0, 177
  %v653 = vld [vmem:[%s652] sm:$0x8]
  %vm654 = vcmask 1043459
  %v655 = vsel %vm654, %v653, %v651
  %656 = vrot.lane.b32.xlu0 %v655, 32
  %v657 = vpop.permute.xlu0 %656
  %vm658 = vcmask 326912
  %s659 = scalar_lea.vmem %s1, 10
  %660 = vst.msk [vmem:[%s659] sm:$0xf] %vm658, %v657
  %s661 = scalar_lea.vmem %s0, 3
  %v662 = vld [vmem:[%s661] sm:$0x1]
  %s663 = scalar_lea.vmem %s0, 34
  %v664 = vld [vmem:[%s663] sm:$0x2]
  %vm665 = vcmask 1041409
  %v666 = vsel %vm665, %v664, %v662
  %s667 = scalar_lea.vmem %s0, 65
  %v668 = vld [vmem:[%s667] sm:$0x4]
  %vm669 = vcmask 1042434
  %v670 = vsel %vm669, %v668, %v666
  %s671 = scalar_lea.vmem %s0, 96
  %v672 = vld [vmem:[%s671] sm:$0x8]
  %vm673 = vcmask 1043459
  %v674 = vsel %vm673, %v672, %v670
  %s675 = scalar_lea.vmem %s0, 127
  %v676 = vld [vmem:[%s675] sm:$0x10]
  %vm677 = vcmask 1044484
  %v678 = vsel %vm677, %v676, %v674
  %s679 = scalar_lea.vmem %s0, 883
  %s680 = smov 96
  %v681 = vld [vmem:[%s679] ss:$-144 sm:%s680]
  %vm682 = vcmask 1046533
  %v683 = vsel %vm682, %v681, %v678
  %s684 = scalar_lea.vmem %s0, 44
  %v685 = vld [vmem:[%s684] sm:$0x80]
  %vm686 = vcmask 1047559
  %v687 = vsel %vm686, %v685, %v683
  %688 = vrot.lane.b32.xlu0 %v687, 24
  %v689 = vpop.permute.xlu0 %688
  %vm690 = vcmask 261312
  %691 = vst.msk [vmem:[%s1] sm:$0x3f] %vm690, %v689
  %s692 = scalar_lea.vmem %s1, 2
  %693 = vst.msk [vmem:[%s692] sm:$0xc0] %vm690, %v689
  %s694 = scalar_lea.vmem %s0, 83
  %v695 = vld [vmem:[%s694] sm:$0x1]
  %s696 = scalar_lea.vmem %s0, 114
  %v697 = vld [vmem:[%s696] sm:$0x2]
  %vm698 = vcmask 1041409
  %v699 = vsel %vm698, %v697, %v695
  %s700 = scalar_lea.vmem %s0, 145
  %v701 = vld [vmem:[%s700] sm:$0x4]
  %vm702 = vcmask 1042434
  %v703 = vsel %vm702, %v701, %v699
  %s704 = scalar_lea.vmem %s0, 176
  %v705 = vld [vmem:[%s704] sm:$0x8]
  %vm706 = vcmask 1043459
  %v707 = vsel %vm706, %v705, %v703
  %708 = vrot.lane.b32.xlu0 %v707, 24
  %v709 = vpop.permute.xlu0 %708
  %vm710 = vcmask 261312
  %s711 = scalar_lea.vmem %s1, 10
  %712 = vst.msk [vmem:[%s711] sm:$0xf] %vm710, %v709
  %s713 = scalar_lea.vmem %s0, 2
  %v714 = vld [vmem:[%s713] sm:$0x1]
  %s715 = scalar_lea.vmem %s0, 33
  %v716 = vld [vmem:[%s715] sm:$0x2]
  %vm717 = vcmask 1041409
  %v718 = vsel %vm717, %v716, %v714
  %s719 = scalar_lea.vmem %s0, 64
  %v720 = vld [vmem:[%s719] sm:$0x4]
  %vm721 = vcmask 1042434
  %v722 = vsel %vm721, %v720, %v718
  %s723 = scalar_lea.vmem %s0, 95
  %v724 = vld [vmem:[%s723] sm:$0x8]
  %vm725 = vcmask 1043459
  %v726 = vsel %vm725, %v724, %v722
  %s727 = scalar_lea.vmem %s0, 126
  %v728 = vld [vmem:[%s727] sm:$0x10]
  %vm729 = vcmask 1044484
  %v730 = vsel %vm729, %v728, %v726
  %s731 = scalar_lea.vmem %s0, 882
  %s732 = smov 96
  %v733 = vld [vmem:[%s731] ss:$-144 sm:%s732]
  %vm734 = vcmask 1046533
  %v735 = vsel %vm734, %v733, %v730
  %s736 = scalar_lea.vmem %s0, 43
  %v737 = vld [vmem:[%s736] sm:$0x80]
  %vm738 = vcmask 1047559
  %v739 = vsel %vm738, %v737, %v735
  %740 = vrot.lane.b32.xlu0 %v739, 16
  %v741 = vpop.permute.xlu0 %740
  %vm742 = vcmask 195712
  %743 = vst.msk [vmem:[%s1] sm:$0x3f] %vm742, %v741
  %s744 = scalar_lea.vmem %s1, 2
  %745 = vst.msk [vmem:[%s744] sm:$0xc0] %vm742, %v741
  %s746 = scalar_lea.vmem %s0, 82
  %v747 = vld [vmem:[%s746] sm:$0x1]
  %s748 = scalar_lea.vmem %s0, 113
  %v749 = vld [vmem:[%s748] sm:$0x2]
  %vm750 = vcmask 1041409
  %v751 = vsel %vm750, %v749, %v747
  %s752 = scalar_lea.vmem %s0, 144
  %v753 = vld [vmem:[%s752] sm:$0x4]
  %vm754 = vcmask 1042434
  %v755 = vsel %vm754, %v753, %v751
  %s756 = scalar_lea.vmem %s0, 175
  %v757 = vld [vmem:[%s756] sm:$0x8]
  %vm758 = vcmask 1043459
  %v759 = vsel %vm758, %v757, %v755
  %760 = vrot.lane.b32.xlu0 %v759, 16
  %v761 = vpop.permute.xlu0 %760
  %vm762 = vcmask 195712
  %s763 = scalar_lea.vmem %s1, 10
  %764 = vst.msk [vmem:[%s763] sm:$0xf] %vm762, %v761
  %s765 = scalar_lea.vmem %s0, 1
  %v766 = vld [vmem:[%s765] sm:$0x1]
  %s767 = scalar_lea.vmem %s0, 32
  %v768 = vld [vmem:[%s767] sm:$0x2]
  %vm769 = vcmask 1041409
  %v770 = vsel %vm769, %v768, %v766
  %s771 = scalar_lea.vmem %s0, 63
  %v772 = vld [vmem:[%s771] sm:$0x4]
  %vm773 = vcmask 1042434
  %v774 = vsel %vm773, %v772, %v770
  %s775 = scalar_lea.vmem %s0, 94
  %v776 = vld [vmem:[%s775] sm:$0x8]
  %vm777 = vcmask 1043459
  %v778 = vsel %vm777, %v776, %v774
  %s779 = scalar_lea.vmem %s0, 125
  %v780 = vld [vmem:[%s779] sm:$0x10]
  %vm781 = vcmask 1044484
  %v782 = vsel %vm781, %v780, %v778
  %s783 = scalar_lea.vmem %s0, 881
  %s784 = smov 96
  %v785 = vld [vmem:[%s783] ss:$-144 sm:%s784]
  %vm786 = vcmask 1046533
  %v787 = vsel %vm786, %v785, %v782
  %s788 = scalar_lea.vmem %s0, 42
  %v789 = vld [vmem:[%s788] sm:$0x80]
  %vm790 = vcmask 1047559
  %v791 = vsel %vm790, %v789, %v787
  %792 = vrot.lane.b32.xlu0 %v791, 8
  %v793 = vpop.permute.xlu0 %792
  %vm794 = vcmask 130112
  %795 = vst.msk [vmem:[%s1] sm:$0x3f] %vm794, %v793
  %s796 = scalar_lea.vmem %s1, 2
  %797 = vst.msk [vmem:[%s796] sm:$0xc0] %vm794, %v793
  %s798 = scalar_lea.vmem %s0, 81
  %v799 = vld [vmem:[%s798] sm:$0x1]
  %s800 = scalar_lea.vmem %s0, 112
  %v801 = vld [vmem:[%s800] sm:$0x2]
  %vm802 = vcmask 1041409
  %v803 = vsel %vm802, %v801, %v799
  %s804 = scalar_lea.vmem %s0, 143
  %v805 = vld [vmem:[%s804] sm:$0x4]
  %vm806 = vcmask 1042434
  %v807 = vsel %vm806, %v805, %v803
  %s808 = scalar_lea.vmem %s0, 174
  %v809 = vld [vmem:[%s808] sm:$0x8]
  %vm810 = vcmask 1043459
  %v811 = vsel %vm810, %v809, %v807
  %812 = vrot.lane.b32.xlu0 %v811, 8
  %v813 = vpop.permute.xlu0 %812
  %vm814 = vcmask 130112
  %s815 = scalar_lea.vmem %s1, 10
  %816 = vst.msk [vmem:[%s815] sm:$0xf] %vm814, %v813

// kernel: residual_forward.1
$region0: #{residual_forward.1}
  #allocation0 [shape = 'u32[]', space=smem, size = 0x4, offset = 0x4, fixed_abs, tag = 'smem constant byte address 0x4 - core index']
  #allocation1 [shape = 'u32[72,128]{1,0:T(1,128)}', space=vmem, size = 0x9000, scoped, tag = 'internal scratch']
  %s0 = inlined_call_operand.vmem [shape: f32[16,128], index: 0, kind: input, shape index: {}]
  %s1 = inlined_call_operand.vmem [shape: f32[3,16,16], index: 1, kind: input, shape index: {}]
  %s2 = inlined_call_operand.vmem [shape: f32[3,128,256], index: 2, kind: input, shape index: {}]
  %s3 = inlined_call_operand.vmem [shape: f32[3,256,256], index: 3, kind: input, shape index: {}]
  %s4 = inlined_call_operand.vmem [shape: f32[128,256], index: 4, kind: input, shape index: {}]
  %s5 = inlined_call_operand.vmem [shape: f32[256,256], index: 5, kind: input, shape index: {}]
  %s6 = inlined_call_operand.vmem [shape: f32[6,256], index: 6, kind: input, shape index: {}]
  %s7 = inlined_call_operand.vmem [shape: f32[16,256], index: 7, kind: output, shape index: {}]
  %s8 = sld [smem:[#allocation0]]
  $region38: #{residual_forward.1} parent=0
    _
  %s10 = ssub.s32 1, %s8
  %s11 = scalar_select 0, %s10, %s8
  // Predicated region
  $region2: #{residual_forward.1} parent=0 // pred_check
    _
  $region3: #{residual_forward.1} parent=0 // pred_check_branch
    %13 = sbr.rel (0) target = $region5
  $region4: #{residual_forward.1} parent=0 // pred_region
    _
  $region5: #{residual_forward.1} parent=0 // pred_fallthru
    _
  // Predicated region
  $region6: #{residual_forward.1} parent=0 // pred_check
    _
  $region7: #{residual_forward.1} parent=0 // pred_check_branch
    %15 = sbr.rel (0) target = $region9
  $region8: #{residual_forward.1} parent=0 // pred_region
    _
  $region9: #{residual_forward.1} parent=0 // pred_fallthru
    _
  // Predicated region
  $region10: #{residual_forward.1} parent=0 // pred_check
    _
  $region11: #{residual_forward.1} parent=0 // pred_check_branch
    %17 = sbr.rel (0) target = $region13
  $region12: #{residual_forward.1} parent=0 // pred_region
    _
  $region13: #{residual_forward.1} parent=0 // pred_fallthru
    _
  // Predicated region
  $region14: #{residual_forward.1} parent=0 // pred_check
    _
  $region15: #{residual_forward.1} parent=0 // pred_check_branch
    %19 = sbr.rel (0) target = $region17
  $region16: #{residual_forward.1} parent=0 // pred_region
    _
  $region17: #{residual_forward.1} parent=0 // pred_fallthru
    _
  // Predicated region
  $region18: #{residual_forward.1} parent=0 // pred_check
    _
  $region19: #{residual_forward.1} parent=0 // pred_check_branch
    %21 = sbr.rel (0) target = $region21
  $region20: #{residual_forward.1} parent=0 // pred_region
    _
  $region21: #{residual_forward.1} parent=0 // pred_fallthru
    _
  // Predicated region
  $region22: #{residual_forward.1} parent=0 // pred_check
    _
  $region23: #{residual_forward.1} parent=0 // pred_check_branch
    %23 = sbr.rel (0) target = $region25
  $region24: #{residual_forward.1} parent=0 // pred_region
    _
  $region25: #{residual_forward.1} parent=0 // pred_fallthru
    _
  // Predicated region
  $region26: #{residual_forward.1} parent=0 // pred_check
    _
  $region27: #{residual_forward.1} parent=0 // pred_check_branch
    %25 = sbr.rel (0) target = $region29
  $region28: #{residual_forward.1} parent=0 // pred_region
    _
  $region29: #{residual_forward.1} parent=0 // pred_fallthru
    _
  %v26 = vld [vmem:[%s0] sm:$0xff]
  %v27 = vld [vmem:[%s0 + $0x8] sm:$0xff]
  %v28 = vld [vmem:[%s5] sm:$0xff]
  %v29 = vld [vmem:[%s5 + $0x8] sm:$0xff]
  %v30 = vld [vmem:[%s5 + $0x10] sm:$0xff]
  %v31 = vld [vmem:[%s5 + $0x18] sm:$0xff]
  %v32 = vld [vmem:[%s5 + $0x20] sm:$0xff]
  %v33 = vld [vmem:[%s5 + $0x28] sm:$0xff]
  %v34 = vld [vmem:[%s5 + $0x30] sm:$0xff]
  %v35 = vld [vmem:[%s5 + $0x38] sm:$0xff]
  %v36 = vld [vmem:[%s5 + $0x40] sm:$0xff]
  %v37 = vld [vmem:[%s5 + $0x48] sm:$0xff]
  %v38 = vld [vmem:[%s5 + $0x50] sm:$0xff]
  %v39 = vld [vmem:[%s5 + $0x58] sm:$0xff]
  %v40 = vld [vmem:[%s5 + $0x60] sm:$0xff]
  %v41 = vld [vmem:[%s5 + $0x68] sm:$0xff]
  %v42 = vld [vmem:[%s5 + $0x70] sm:$0xff]
  %v43 = vld [vmem:[%s5 + $0x78] sm:$0xff]
  %v44 = vld [vmem:[%s5 + $0x80] sm:$0xff]
  %v45 = vld [vmem:[%s5 + $0x88] sm:$0xff]
  %v46 = vld [vmem:[%s5 + $0x90] sm:$0xff]
  %v47 = vld [vmem:[%s5 + $0x98] sm:$0xff]
  %v48 = vld [vmem:[%s5 + $0xa0] sm:$0xff]
  %v49 = vld [vmem:[%s5 + $0xa8] sm:$0xff]
  %v50 = vld [vmem:[%s5 + $0xb0] sm:$0xff]
  %v51 = vld [vmem:[%s5 + $0xb8] sm:$0xff]
  %v52 = vld [vmem:[%s5 + $0xc0] sm:$0xff]
  %v53 = vld [vmem:[%s5 + $0xc8] sm:$0xff]
  %v54 = vld [vmem:[%s5 + $0xd0] sm:$0xff]
  %v55 = vld [vmem:[%s5 + $0xd8] sm:$0xff]
  %v56 = vld [vmem:[%s5 + $0xe0] sm:$0xff]
  %v57 = vld [vmem:[%s5 + $0xe8] sm:$0xff]
  %v58 = vld [vmem:[%s5 + $0xf0] sm:$0xff]
  %v59 = vld [vmem:[%s5 + $0xf8] sm:$0xff]
  %v60 = vld [vmem:[%s5 + $0x100] sm:$0xff]
  %v61 = vld [vmem:[%s5 + $0x108] sm:$0xff]
  %v62 = vld [vmem:[%s5 + $0x110] sm:$0xff]
  %v63 = vld [vmem:[%s5 + $0x118] sm:$0xff]
  %v64 = vld [vmem:[%s5 + $0x120] sm:$0xff]
  %v65 = vld [vmem:[%s5 + $0x128] sm:$0xff]
  %v66 = vld [vmem:[%s5 + $0x130] sm:$0xff]
  %v67 = vld [vmem:[%s5 + $0x138] sm:$0xff]
  %v68 = vld [vmem:[%s5 + $0x140] sm:$0xff]
  %v69 = vld [vmem:[%s5 + $0x148] sm:$0xff]
  %v70 = vld [vmem:[%s5 + $0x150] sm:$0xff]
  %v71 = vld [vmem:[%s5 + $0x158] sm:$0xff]
  %v72 = vld [vmem:[%s5 + $0x160] sm:$0xff]
  %v73 = vld [vmem:[%s5 + $0x168] sm:$0xff]
  %v74 = vld [vmem:[%s5 + $0x170] sm:$0xff]
  %v75 = vld [vmem:[%s5 + $0x178] sm:$0xff]
  %v76 = vld [vmem:[%s5 + $0x180] sm:$0xff]
  %v77 = vld [vmem:[%s5 + $0x188] sm:$0xff]
  %v78 = vld [vmem:[%s5 + $0x190] sm:$0xff]
  %v79 = vld [vmem:[%s5 + $0x198] sm:$0xff]
  %v80 = vld [vmem:[%s5 + $0x1a0] sm:$0xff]
  %v81 = vld [vmem:[%s5 + $0x1a8] sm:$0xff]
  %v82 = vld [vmem:[%s5 + $0x1b0] sm:$0xff]
  %v83 = vld [vmem:[%s5 + $0x1b8] sm:$0xff]
  %v84 = vld [vmem:[%s5 + $0x1c0] sm:$0xff]
  %v85 = vld [vmem:[%s5 + $0x1c8] sm:$0xff]
  %v86 = vld [vmem:[%s5 + $0x1d0] sm:$0xff]
  %v87 = vld [vmem:[%s5 + $0x1d8] sm:$0xff]
  %v88 = vld [vmem:[%s5 + $0x1e0] sm:$0xff]
  %v89 = vld [vmem:[%s5 + $0x1e8] sm:$0xff]
  %v90 = vld [vmem:[%s5 + $0x1f0] sm:$0xff]
  %v91 = vld [vmem:[%s5 + $0x1f8] sm:$0xff]
  %v92 = vld [vmem:[%s6] sm:$0x3f]
  %v93 = vld [vmem:[%s6 + $0x8] sm:$0x3f]
  %v94 = vld [vmem:[%s2] sm:$0xff]
  %v95 = vld [vmem:[%s2 + $0x8] sm:$0xff]
  %v96 = vld [vmem:[%s2 + $0x10] sm:$0xff]
  %v97 = vld [vmem:[%s2 + $0x18] sm:$0xff]
  %v98 = vld [vmem:[%s2 + $0x20] sm:$0xff]
  %v99 = vld [vmem:[%s2 + $0x28] sm:$0xff]
  %v100 = vld [vmem:[%s2 + $0x30] sm:$0xff]
  %v101 = vld [vmem:[%s2 + $0x38] sm:$0xff]
  %v102 = vld [vmem:[%s2 + $0x40] sm:$0xff]
  %v103 = vld [vmem:[%s2 + $0x48] sm:$0xff]
  %v104 = vld [vmem:[%s2 + $0x50] sm:$0xff]
  %v105 = vld [vmem:[%s2 + $0x58] sm:$0xff]
  %v106 = vld [vmem:[%s2 + $0x60] sm:$0xff]
  %v107 = vld [vmem:[%s2 + $0x68] sm:$0xff]
  %v108 = vld [vmem:[%s2 + $0x70] sm:$0xff]
  %v109 = vld [vmem:[%s2 + $0x78] sm:$0xff]
  %v110 = vld [vmem:[%s2 + $0x80] sm:$0xff]
  %v111 = vld [vmem:[%s2 + $0x88] sm:$0xff]
  %v112 = vld [vmem:[%s2 + $0x90] sm:$0xff]
  %v113 = vld [vmem:[%s2 + $0x98] sm:$0xff]
  %v114 = vld [vmem:[%s2 + $0xa0] sm:$0xff]
  %v115 = vld [vmem:[%s2 + $0xa8] sm:$0xff]
  %v116 = vld [vmem:[%s2 + $0xb0] sm:$0xff]
  %v117 = vld [vmem:[%s2 + $0xb8] sm:$0xff]
  %v118 = vld [vmem:[%s2 + $0xc0] sm:$0xff]
  %v119 = vld [vmem:[%s2 + $0xc8] sm:$0xff]
  %v120 = vld [vmem:[%s2 + $0xd0] sm:$0xff]
  %v121 = vld [vmem:[%s2 + $0xd8] sm:$0xff]
  %v122 = vld [vmem:[%s2 + $0xe0] sm:$0xff]
  %v123 = vld [vmem:[%s2 + $0xe8] sm:$0xff]
  %v124 = vld [vmem:[%s2 + $0xf0] sm:$0xff]
  %v125 = vld [vmem:[%s2 + $0xf8] sm:$0xff]
  %126 = vmatpush.msra.mxu0 %v124
  %127 = vmatpush.msra.mxu0 %v122
  %128 = vmatpush.msra.mxu0 %v120
  %129 = vmatpush.msra.mxu0 %v118
  %130 = vmatpush.msra.mxu0 %v116
  %131 = vmatpush.msra.mxu0 %v114
  %132 = vmatpush.msra.mxu0 %v112
  %133 = vmatpush.msra.mxu0 %v110
  %134 = vmatpush.msra.mxu0 %v108
  %135 = vmatpush.msra.mxu0 %v106
  %136 = vmatpush.msra.mxu0 %v104
  %137 = vmatpush.msra.mxu0 %v102
  %138 = vmatpush.msra.mxu0 %v100
  %139 = vmatpush.msra.mxu0 %v98
  %140 = vmatpush.msra.mxu0 %v96
  %141 = vmatpush.msra.mxu0 %v94
  %142 = vmatmul.f32.gmra.mxu0 %v26
  %v143 = vpop.f32.mrf.mxu0
  %v144 = vadd.f32 0.0, %v143
  %145 = vmatmul.f32.gmra.mxu0 %v27
  %v146 = vpop.f32.mrf.mxu0
  %v147 = vadd.f32 0.0, %v146
  %148 = vdwg.mxu0
  %149 = vmatpush.msra.mxu0 %v125
  %150 = vmatpush.msra.mxu0 %v123
  %151 = vmatpush.msra.mxu0 %v121
  %152 = vmatpush.msra.mxu0 %v119
  %153 = vmatpush.msra.mxu0 %v117
  %154 = vmatpush.msra.mxu0 %v115
  %155 = vmatpush.msra.mxu0 %v113
  %156 = vmatpush.msra.mxu0 %v111
  %157 = vmatpush.msra.mxu0 %v109
  %158 = vmatpush.msra.mxu0 %v107
  %159 = vmatpush.msra.mxu0 %v105
  %160 = vmatpush.msra.mxu0 %v103
  %161 = vmatpush.msra.mxu0 %v101
  %162 = vmatpush.msra.mxu0 %v99
  %163 = vmatpush.msra.mxu0 %v97
  %164 = vmatpush.msra.mxu0 %v95
  %165 = vmatmul.f32.gmra.mxu0 %v26
  %v166 = vpop.f32.mrf.mxu0
  %v167 = vadd.f32 0.0, %v166
  %168 = vmatmul.f32.gmra.mxu0 %v27
  %v169 = vpop.f32.mrf.mxu0
  %v170 = vadd.f32 0.0, %v169
  %171 = vdwg.mxu0
  %v172 = vld [vmem:[%s1] sm:$0xff]
  %v173 = vld [vmem:[%s1 + $0x8] sm:$0xff]
  %s174 = scalar_lea.vmem %s2, 256
  %v175 = vld [vmem:[%s174] sm:$0xff]
  %v176 = vld [vmem:[%s174 + $0x8] sm:$0xff]
  %v177 = vld [vmem:[%s174 + $0x10] sm:$0xff]
  %v178 = vld [vmem:[%s174 + $0x18] sm:$0xff]
  %v179 = vld [vmem:[%s174 + $0x20] sm:$0xff]
  %v180 = vld [vmem:[%s174 + $0x28] sm:$0xff]
  %v181 = vld [vmem:[%s174 + $0x30] sm:$0xff]
  %v182 = vld [vmem:[%s174 + $0x38] sm:$0xff]
  %v183 = vld [vmem:[%s174 + $0x40] sm:$0xff]
  %v184 = vld [vmem:[%s174 + $0x48] sm:$0xff]
  %v185 = vld [vmem:[%s174 + $0x50] sm:$0xff]
  %v186 = vld [vmem:[%s174 + $0x58] sm:$0xff]
  %v187 = vld [vmem:[%s174 + $0x60] sm:$0xff]
  %v188 = vld [vmem:[%s174 + $0x68] sm:$0xff]
  %v189 = vld [vmem:[%s174 + $0x70] sm:$0xff]
  %v190 = vld [vmem:[%s174 + $0x78] sm:$0xff]
  %v191 = vld [vmem:[%s174 + $0x80] sm:$0xff]
  %v192 = vld [vmem:[%s174 + $0x88] sm:$0xff]
  %v193 = vld [vmem:[%s174 + $0x90] sm:$0xff]
  %v194 = vld [vmem:[%s174 + $0x98] sm:$0xff]
  %v195 = vld [vmem:[%s174 + $0xa0] sm:$0xff]
  %v196 = vld [vmem:[%s174 + $0xa8] sm:$0xff]
  %v197 = vld [vmem:[%s174 + $0xb0] sm:$0xff]
  %v198 = vld [vmem:[%s174 + $0xb8] sm:$0xff]
  %v199 = vld [vmem:[%s174 + $0xc0] sm:$0xff]
  %v200 = vld [vmem:[%s174 + $0xc8] sm:$0xff]
  %v201 = vld [vmem:[%s174 + $0xd0] sm:$0xff]
  %v202 = vld [vmem:[%s174 + $0xd8] sm:$0xff]
  %v203 = vld [vmem:[%s174 + $0xe0] sm:$0xff]
  %v204 = vld [vmem:[%s174 + $0xe8] sm:$0xff]
  %v205 = vld [vmem:[%s174 + $0xf0] sm:$0xff]
  %v206 = vld [vmem:[%s174 + $0xf8] sm:$0xff]
  %207 = vmatpush.msra.mxu0 %v205
  %208 = vmatpush.msra.mxu0 %v203
  %209 = vmatpush.msra.mxu0 %v201
  %210 = vmatpush.msra.mxu0 %v199
  %211 = vmatpush.msra.mxu0 %v197
  %212 = vmatpush.msra.mxu0 %v195
  %213 = vmatpush.msra.mxu0 %v193
  %214 = vmatpush.msra.mxu0 %v191
  %215 = vmatpush.msra.mxu0 %v189
  %216 = vmatpush.msra.mxu0 %v187
  %217 = vmatpush.msra.mxu0 %v185
  %218 = vmatpush.msra.mxu0 %v183
  %219 = vmatpush.msra.mxu0 %v181
  %220 = vmatpush.msra.mxu0 %v179
  %221 = vmatpush.msra.mxu0 %v177
  %222 = vmatpush.msra.mxu0 %v175
  %223 = vmatmul.f32.gmra.mxu0 %v26
  %v224 = vpop.f32.mrf.mxu0
  %v225 = vadd.f32 0.0, %v224
  %226 = vmatmul.f32.gmra.mxu0 %v27
  %v227 = vpop.f32.mrf.mxu0
  %v228 = vadd.f32 0.0, %v227
  %229 = vdwg.mxu0
  %230 = vmatpush.msra.mxu0 %v206
  %231 = vmatpush.msra.mxu0 %v204
  %232 = vmatpush.msra.mxu0 %v202
  %233 = vmatpush.msra.mxu0 %v200
  %234 = vmatpush.msra.mxu0 %v198
  %235 = vmatpush.msra.mxu0 %v196
  %236 = vmatpush.msra.mxu0 %v194
  %237 = vmatpush.msra.mxu0 %v192
  %238 = vmatpush.msra.mxu0 %v190
  %239 = vmatpush.msra.mxu0 %v188
  %240 = vmatpush.msra.mxu0 %v186
  %241 = vmatpush.msra.mxu0 %v184
  %242 = vmatpush.msra.mxu0 %v182
  %243 = vmatpush.msra.mxu0 %v180
  %244 = vmatpush.msra.mxu0 %v178
  %245 = vmatpush.msra.mxu0 %v176
  %246 = vmatmul.f32.gmra.mxu0 %v26
  %v247 = vpop.f32.mrf.mxu0
  %v248 = vadd.f32 0.0, %v247
  %249 = vmatmul.f32.gmra.mxu0 %v27
  %v250 = vpop.f32.mrf.mxu0
  %v251 = vadd.f32 0.0, %v250
  %252 = vdwg.mxu0
  %s253 = scalar_lea.vmem %s1, 16
  %v254 = vld [vmem:[%s253] sm:$0xff]
  %v255 = vld [vmem:[%s253 + $0x8] sm:$0xff]
  %vm256 = vcmask 130048
  %v258 = vsel %vm256, %v254, 0
  %v261 = vsel %vm256, %v255, 0
  %263 = vmatpush.msra.mxu0 0.0
  %264 = vmatpush.msra.mxu0 0.0
  %265 = vmatpush.msra.mxu0 0.0
  %266 = vmatpush.msra.mxu0 0.0
  %267 = vmatpush.msra.mxu0 0.0
  %268 = vmatpush.msra.mxu0 0.0
  %269 = vmatpush.msra.mxu0 0.0
  %270 = vmatpush.msra.mxu0 0.0
  %271 = vmatpush.msra.mxu0 0.0
  %272 = vmatpush.msra.mxu0 0.0
  %273 = vmatpush.msra.mxu0 0.0
  %274 = vmatpush.msra.mxu0 0.0
  %275 = vmatpush.msra.mxu0 0.0
  %276 = vmatpush.msra.mxu0 0.0
  %277 = vmatpush.msra.mxu0 %v228
  %278 = vmatpush.msra.mxu0 %v225
  %279 = vmatmul.f32.gmra.mxu0 %v258
  %v280 = vpop.f32.mrf.mxu0
  %v281 = vadd.f32 0.0, %v280
  %282 = vmatmul.f32.gmra.mxu0 %v261
  %v283 = vpop.f32.mrf.mxu0
  %v284 = vadd.f32 0.0, %v283
  %285 = vdwg.mxu0
  %286 = vmatpush.msra.mxu0 0.0
  %287 = vmatpush.msra.mxu0 0.0
  %288 = vmatpush.msra.mxu0 0.0
  %289 = vmatpush.msra.mxu0 0.0
  %290 = vmatpush.msra.mxu0 0.0
  %291 = vmatpush.msra.mxu0 0.0
  %292 = vmatpush.msra.mxu0 0.0
  %293 = vmatpush.msra.mxu0 0.0
  %294 = vmatpush.msra.mxu0 0.0
  %295 = vmatpush.msra.mxu0 0.0
  %296 = vmatpush.msra.mxu0 0.0
  %297 = vmatpush.msra.mxu0 0.0
  %298 = vmatpush.msra.mxu0 0.0
  %299 = vmatpush.msra.mxu0 0.0
  %300 = vmatpush.msra.mxu0 %v251
  %301 = vmatpush.msra.mxu0 %v248
  %302 = vmatmul.f32.gmra.mxu0 %v258
  %v303 = vpop.f32.mrf.mxu0
  %v304 = vadd.f32 0.0, %v303
  %305 = vmatmul.f32.gmra.mxu0 %v261
  %v306 = vpop.f32.mrf.mxu0
  %v307 = vadd.f32 0.0, %v306
  %308 = vdwg.mxu0
  %v310 = vsel %vm256, %v172, 0
  %v313 = vsel %vm256, %v173, 0
  %315 = vmatpush.msra.mxu0 0.0
  %316 = vmatpush.msra.mxu0 0.0
  %317 = vmatpush.msra.mxu0 0.0
  %318 = vmatpush.msra.mxu0 0.0
  %319 = vmatpush.msra.mxu0 0.0
  %320 = vmatpush.msra.mxu0 0.0
  %321 = vmatpush.msra.mxu0 0.0
  %322 = vmatpush.msra.mxu0 0.0
  %323 = vmatpush.msra.mxu0 0.0
  %324 = vmatpush.msra.mxu0 0.0
  %325 = vmatpush.msra.mxu0 0.0
  %326 = vmatpush.msra.mxu0 0.0
  %327 = vmatpush.msra.mxu0 0.0
  %328 = vmatpush.msra.mxu0 0.0
  %329 = vmatpush.msra.mxu0 %v147
  %330 = vmatpush.msra.mxu0 %v144
  %331 = vmatmul.f32.gmra.mxu0 %v310
  %v332 = vpop.f32.mrf.mxu0
  %v333 = vadd.f32 %v281, %v332
  %334 = vmatmul.f32.gmra.mxu0 %v313
  %v335 = vpop.f32.mrf.mxu0
  %v336 = vadd.f32 %v284, %v335
  %337 = vdwg.mxu0
  %338 = vmatpush.msra.mxu0 0.0
  %339 = vmatpush.msra.mxu0 0.0
  %340 = vmatpush.msra.mxu0 0.0
  %341 = vmatpush.msra.mxu0 0.0
  %342 = vmatpush.msra.mxu0 0.0
  %343 = vmatpush.msra.mxu0 0.0
  %344 = vmatpush.msra.mxu0 0.0
  %345 = vmatpush.msra.mxu0 0.0
  %346 = vmatpush.msra.mxu0 0.0
  %347 = vmatpush.msra.mxu0 0.0
  %348 = vmatpush.msra.mxu0 0.0
  %349 = vmatpush.msra.mxu0 0.0
  %350 = vmatpush.msra.mxu0 0.0
  %351 = vmatpush.msra.mxu0 0.0
  %352 = vmatpush.msra.mxu0 %v170
  %353 = vmatpush.msra.mxu0 %v167
  %354 = vmatmul.f32.gmra.mxu0 %v310
  %v355 = vpop.f32.mrf.mxu0
  %v356 = vadd.f32 %v304, %v355
  %357 = vmatmul.f32.gmra.mxu0 %v313
  %v358 = vpop.f32.mrf.mxu0
  %v359 = vadd.f32 %v307, %v358
  %360 = vdwg.mxu0
  %s361 = scalar_lea.vmem %s2, 512
  %v362 = vld [vmem:[%s361] sm:$0xff]
  %v363 = vld [vmem:[%s361 + $0x8] sm:$0xff]
  %v364 = vld [vmem:[%s361 + $0x10] sm:$0xff]
  %v365 = vld [vmem:[%s361 + $0x18] sm:$0xff]
  %v366 = vld [vmem:[%s361 + $0x20] sm:$0xff]
  %v367 = vld [vmem:[%s361 + $0x28] sm:$0xff]
  %v368 = vld [vmem:[%s361 + $0x30] sm:$0xff]
  %v369 = vld [vmem:[%s361 + $0x38] sm:$0xff]
  %v370 = vld [vmem:[%s361 + $0x40] sm:$0xff]
  %v371 = vld [vmem:[%s361 + $0x48] sm:$0xff]
  %v372 = vld [vmem:[%s361 + $0x50] sm:$0xff]
  %v373 = vld [vmem:[%s361 + $0x58] sm:$0xff]
  %v374 = vld [vmem:[%s361 + $0x60] sm:$0xff]
  %v375 = vld [vmem:[%s361 + $0x68] sm:$0xff]
  %v376 = vld [vmem:[%s361 + $0x70] sm:$0xff]
  %v377 = vld [vmem:[%s361 + $0x78] sm:$0xff]
  %v378 = vld [vmem:[%s361 + $0x80] sm:$0xff]
  %v379 = vld [vmem:[%s361 + $0x88] sm:$0xff]
  %v380 = vld [vmem:[%s361 + $0x90] sm:$0xff]
  %v381 = vld [vmem:[%s361 + $0x98] sm:$0xff]
  %v382 = vld [vmem:[%s361 + $0xa0] sm:$0xff]
  %v383 = vld [vmem:[%s361 + $0xa8] sm:$0xff]
  %v384 = vld [vmem:[%s361 + $0xb0] sm:$0xff]
  %v385 = vld [vmem:[%s361 + $0xb8] sm:$0xff]
  %v386 = vld [vmem:[%s361 + $0xc0] sm:$0xff]
  %v387 = vld [vmem:[%s361 + $0xc8] sm:$0xff]
  %v388 = vld [vmem:[%s361 + $0xd0] sm:$0xff]
  %v389 = vld [vmem:[%s361 + $0xd8] sm:$0xff]
  %v390 = vld [vmem:[%s361 + $0xe0] sm:$0xff]
  %v391 = vld [vmem:[%s361 + $0xe8] sm:$0xff]
  %v392 = vld [vmem:[%s361 + $0xf0] sm:$0xff]
  %v393 = vld [vmem:[%s361 + $0xf8] sm:$0xff]
  %394 = vmatpush.msra.mxu0 %v392
  %395 = vmatpush.msra.mxu0 %v390
  %396 = vmatpush.msra.mxu0 %v388
  %397 = vmatpush.msra.mxu0 %v386
  %398 = vmatpush.msra.mxu0 %v384
  %399 = vmatpush.msra.mxu0 %v382
  %400 = vmatpush.msra.mxu0 %v380
  %401 = vmatpush.msra.mxu0 %v378
  %402 = vmatpush.msra.mxu0 %v376
  %403 = vmatpush.msra.mxu0 %v374
  %404 = vmatpush.msra.mxu0 %v372
  %405 = vmatpush.msra.mxu0 %v370
  %406 = vmatpush.msra.mxu0 %v368
  %407 = vmatpush.msra.mxu0 %v366
  %408 = vmatpush.msra.mxu0 %v364
  %409 = vmatpush.msra.mxu0 %v362
  %410 = vmatmul.f32.gmra.mxu0 %v26
  %v411 = vpop.f32.mrf.mxu0
  %v412 = vadd.f32 0.0, %v411
  %413 = vmatmul.f32.gmra.mxu0 %v27
  %v414 = vpop.f32.mrf.mxu0
  %v415 = vadd.f32 0.0, %v414
  %416 = vdwg.mxu0
  %417 = vmatpush.msra.mxu0 %v393
  %418 = vmatpush.msra.mxu0 %v391
  %419 = vmatpush.msra.mxu0 %v389
  %420 = vmatpush.msra.mxu0 %v387
  %421 = vmatpush.msra.mxu0 %v385
  %422 = vmatpush.msra.mxu0 %v383
  %423 = vmatpush.msra.mxu0 %v381
  %424 = vmatpush.msra.mxu0 %v379
  %425 = vmatpush.msra.mxu0 %v377
  %426 = vmatpush.msra.mxu0 %v375
  %427 = vmatpush.msra.mxu0 %v373
  %428 = vmatpush.msra.mxu0 %v371
  %429 = vmatpush.msra.mxu0 %v369
  %430 = vmatpush.msra.mxu0 %v367
  %431 = vmatpush.msra.mxu0 %v365
  %432 = vmatpush.msra.mxu0 %v363
  %433 = vmatmul.f32.gmra.mxu0 %v26
  %v434 = vpop.f32.mrf.mxu0
  %v435 = vadd.f32 0.0, %v434
  %436 = vmatmul.f32.gmra.mxu0 %v27
  %v437 = vpop.f32.mrf.mxu0
  %v438 = vadd.f32 0.0, %v437
  %439 = vdwg.mxu0
  %s440 = scalar_lea.vmem %s1, 32
  %v441 = vld [vmem:[%s440] sm:$0xff]
  %v442 = vld [vmem:[%s440 + $0x8] sm:$0xff]
  %v444 = vsel %vm256, %v441, 0
  %v447 = vsel %vm256, %v442, 0
  %449 = vmatpush.msra.mxu0 0.0
  %450 = vmatpush.msra.mxu0 0.0
  %451 = vmatpush.msra.mxu0 0.0
  %452 = vmatpush.msra.mxu0 0.0
  %453 = vmatpush.msra.mxu0 0.0
  %454 = vmatpush.msra.mxu0 0.0
  %455 = vmatpush.msra.mxu0 0.0
  %456 = vmatpush.msra.mxu0 0.0
  %457 = vmatpush.msra.mxu0 0.0
  %458 = vmatpush.msra.mxu0 0.0
  %459 = vmatpush.msra.mxu0 0.0
  %460 = vmatpush.msra.mxu0 0.0
  %461 = vmatpush.msra.mxu0 0.0
  %462 = vmatpush.msra.mxu0 0.0
  %463 = vmatpush.msra.mxu0 %v415
  %464 = vmatpush.msra.mxu0 %v412
  %465 = vmatmul.f32.gmra.mxu0 %v444
  %v466 = vpop.f32.mrf.mxu0
  %v467 = vadd.f32 0.0, %v466
  %468 = vmatmul.f32.gmra.mxu0 %v447
  %v469 = vpop.f32.mrf.mxu0
  %v470 = vadd.f32 0.0, %v469
  %471 = vdwg.mxu0
  %472 = vmatpush.msra.mxu0 0.0
  %473 = vmatpush.msra.mxu0 0.0
  %474 = vmatpush.msra.mxu0 0.0
  %475 = vmatpush.msra.mxu0 0.0
  %476 = vmatpush.msra.mxu0 0.0
  %477 = vmatpush.msra.mxu0 0.0
  %478 = vmatpush.msra.mxu0 0.0
  %479 = vmatpush.msra.mxu0 0.0
  %480 = vmatpush.msra.mxu0 0.0
  %481 = vmatpush.msra.mxu0 0.0
  %482 = vmatpush.msra.mxu0 0.0
  %483 = vmatpush.msra.mxu0 0.0
  %484 = vmatpush.msra.mxu0 0.0
  %485 = vmatpush.msra.mxu0 0.0
  %486 = vmatpush.msra.mxu0 %v438
  %487 = vmatpush.msra.mxu0 %v435
  %488 = vmatmul.f32.gmra.mxu0 %v444
  %v489 = vpop.f32.mrf.mxu0
  %v490 = vadd.f32 0.0, %v489
  %491 = vmatmul.f32.gmra.mxu0 %v447
  %v492 = vpop.f32.mrf.mxu0
  %v493 = vadd.f32 0.0, %v492
  %494 = vdwg.mxu0
  %v495 = vadd.f32 %v333, %v467
  %v496 = vadd.f32 %v356, %v490
  %v497 = vadd.f32 %v336, %v470
  %v498 = vadd.f32 %v359, %v493
  %v499 = vadd.f32 %v495, %v497
  %v500 = vrot.slane %v499, 4
  %v501 = vadd.f32 %v499, %v500
  %v502 = vrot.slane %v501, 2
  %v503 = vadd.f32 %v501, %v502
  %v504 = vrot.slane %v503, 1
  %v505 = vadd.f32 %v503, %v504
  %v506 = vadd.f32 %v496, %v498
  %v507 = vrot.slane %v506, 4
  %v508 = vadd.f32 %v506, %v507
  %v509 = vrot.slane %v508, 2
  %v510 = vadd.f32 %v508, %v509
  %v511 = vrot.slane %v510, 1
  %v512 = vadd.f32 %v510, %v511
  %513 = vmatpush.msra.mxu0 %v58
  %514 = vmatpush.msra.mxu0 %v56
  %515 = vmatpush.msra.mxu0 %v54
  %516 = vmatpush.msra.mxu0 %v52
  %517 = vmatpush.msra.mxu0 %v50
  %518 = vmatpush.msra.mxu0 %v48
  %519 = vmatpush.msra.mxu0 %v46
  %520 = vmatpush.msra.mxu0 %v44
  %521 = vmatpush.msra.mxu0 %v42
  %522 = vmatpush.msra.mxu0 %v40
  %523 = vmatpush.msra.mxu0 %v38
  %524 = vmatpush.msra.mxu0 %v36
  %525 = vmatpush.msra.mxu0 %v34
  %526 = vmatpush.msra.mxu0 %v32
  %527 = vmatpush.msra.mxu0 %v30
  %528 = vmatpush.msra.mxu0 %v28
  %529 = vmatmul.f32.gmra.mxu0 %v505
  %v530 = vpop.f32.mrf.mxu0
  %v531 = vadd.f32 0.0, %v530
  %532 = vdwg.mxu0
  %533 = vmatpush.msra.mxu0 %v90
  %534 = vmatpush.msra.mxu0 %v88
  %535 = vmatpush.msra.mxu0 %v86
  %536 = vmatpush.msra.mxu0 %v84
  %537 = vmatpush.msra.mxu0 %v82
  %538 = vmatpush.msra.mxu0 %v80
  %539 = vmatpush.msra.mxu0 %v78
  %540 = vmatpush.msra.mxu0 %v76
  %541 = vmatpush.msra.mxu0 %v74
  %542 = vmatpush.msra.mxu0 %v72
  %543 = vmatpush.msra.mxu0 %v70
  %544 = vmatpush.msra.mxu0 %v68
  %545 = vmatpush.msra.mxu0 %v66
  %546 = vmatpush.msra.mxu0 %v64
  %547 = vmatpush.msra.mxu0 %v62
  %548 = vmatpush.msra.mxu0 %v60
  %549 = vmatmul.f32.gmra.mxu0 %v512
  %v550 = vpop.f32.mrf.mxu0
  %v551 = vadd.f32 %v531, %v550
  %552 = vdwg.mxu0
  %553 = vmatpush.msra.mxu0 %v59
  %554 = vmatpush.msra.mxu0 %v57
  %555 = vmatpush.msra.mxu0 %v55
  %556 = vmatpush.msra.mxu0 %v53
  %557 = vmatpush.msra.mxu0 %v51
  %558 = vmatpush.msra.mxu0 %v49
  %559 = vmatpush.msra.mxu0 %v47
  %560 = vmatpush.msra.mxu0 %v45
  %561 = vmatpush.msra.mxu0 %v43
  %562 = vmatpush.msra.mxu0 %v41
  %563 = vmatpush.msra.mxu0 %v39
  %564 = vmatpush.msra.mxu0 %v37
  %565 = vmatpush.msra.mxu0 %v35
  %566 = vmatpush.msra.mxu0 %v33
  %567 = vmatpush.msra.mxu0 %v31
  %568 = vmatpush.msra.mxu0 %v29
  %569 = vmatmul.f32.gmra.mxu0 %v505
  %v570 = vpop.f32.mrf.mxu0
  %v571 = vadd.f32 0.0, %v570
  %572 = vdwg.mxu0
  %573 = vmatpush.msra.mxu0 %v91
  %574 = vmatpush.msra.mxu0 %v89
  %575 = vmatpush.msra.mxu0 %v87
  %576 = vmatpush.msra.mxu0 %v85
  %577 = vmatpush.msra.mxu0 %v83
  %578 = vmatpush.msra.mxu0 %v81
  %579 = vmatpush.msra.mxu0 %v79
  %580 = vmatpush.msra.mxu0 %v77
  %581 = vmatpush.msra.mxu0 %v75
  %582 = vmatpush.msra.mxu0 %v73
  %583 = vmatpush.msra.mxu0 %v71
  %584 = vmatpush.msra.mxu0 %v69
  %585 = vmatpush.msra.mxu0 %v67
  %586 = vmatpush.msra.mxu0 %v65
  %587 = vmatpush.msra.mxu0 %v63
  %588 = vmatpush.msra.mxu0 %v61
  %589 = vmatmul.f32.gmra.mxu0 %v512
  %v590 = vpop.f32.mrf.mxu0
  %v591 = vadd.f32 %v571, %v590
  %592 = vdwg.mxu0
  %v593 = vmul.f32 %v551, 0.001953125
  %v594 = vmul.f32 %v591, 0.001953125
  %v595 = vperm.slane %v593, 0
  %v596 = vperm.slane %v594, 0
  %v597 = vsub.f32 %v495, %v595
  %v598 = vsub.f32 %v496, %v596
  %v599 = vsub.f32 %v497, %v595
  %v600 = vsub.f32 %v498, %v596
  %v601 = vmul.f32 %v597, %v597
  %v602 = vmul.f32 %v598, %v598
  %v603 = vmul.f32 %v599, %v599
  %v604 = vmul.f32 %v600, %v600
  %v605 = vadd.f32 %v601, %v603
  %v606 = vrot.slane %v605, 4
  %v607 = vadd.f32 %v605, %v606
  %v608 = vrot.slane %v607, 2
  %v609 = vadd.f32 %v607, %v608
  %v610 = vrot.slane %v609, 1
  %v611 = vadd.f32 %v609, %v610
  %v612 = vadd.f32 %v602, %v604
  %v613 = vrot.slane %v612, 4
  %v614 = vadd.f32 %v612, %v613
  %v615 = vrot.slane %v614, 2
  %v616 = vadd.f32 %v614, %v615
  %v617 = vrot.slane %v616, 1
  %v618 = vadd.f32 %v616, %v617
  %619 = vmatpush.msra.mxu0 %v58
  %620 = vmatpush.msra.mxu0 %v56
  %621 = vmatpush.msra.mxu0 %v54
  %622 = vmatpush.msra.mxu0 %v52
  %623 = vmatpush.msra.mxu0 %v50
  %624 = vmatpush.msra.mxu0 %v48
  %625 = vmatpush.msra.mxu0 %v46
  %626 = vmatpush.msra.mxu0 %v44
  %627 = vmatpush.msra.mxu0 %v42
  %628 = vmatpush.msra.mxu0 %v40
  %629 = vmatpush.msra.mxu0 %v38
  %630 = vmatpush.msra.mxu0 %v36
  %631 = vmatpush.msra.mxu0 %v34
  %632 = vmatpush.msra.mxu0 %v32
  %633 = vmatpush.msra.mxu0 %v30
  %634 = vmatpush.msra.mxu0 %v28
  %635 = vmatmul.f32.gmra.mxu0 %v611
  %v636 = vpop.f32.mrf.mxu0
  %v637 = vadd.f32 0.0, %v636
  %638 = vdwg.mxu0
  %639 = vmatpush.msra.mxu0 %v90
  %640 = vmatpush.msra.mxu0 %v88
  %641 = vmatpush.msra.mxu0 %v86
  %642 = vmatpush.msra.mxu0 %v84
  %643 = vmatpush.msra.mxu0 %v82
  %644 = vmatpush.msra.mxu0 %v80
  %645 = vmatpush.msra.mxu0 %v78
  %646 = vmatpush.msra.mxu0 %v76
  %647 = vmatpush.msra.mxu0 %v74
  %648 = vmatpush.msra.mxu0 %v72
  %649 = vmatpush.msra.mxu0 %v70
  %650 = vmatpush.msra.mxu0 %v68
  %651 = vmatpush.msra.mxu0 %v66
  %652 = vmatpush.msra.mxu0 %v64
  %653 = vmatpush.msra.mxu0 %v62
  %654 = vmatpush.msra.mxu0 %v60
  %655 = vmatmul.f32.gmra.mxu0 %v618
  %v656 = vpop.f32.mrf.mxu0
  %v657 = vadd.f32 %v637, %v656
  %658 = vdwg.mxu0
  %659 = vmatpush.msra.mxu0 %v59
  %660 = vmatpush.msra.mxu0 %v57
  %661 = vmatpush.msra.mxu0 %v55
  %662 = vmatpush.msra.mxu0 %v53
  %663 = vmatpush.msra.mxu0 %v51
  %664 = vmatpush.msra.mxu0 %v49
  %665 = vmatpush.msra.mxu0 %v47
  %666 = vmatpush.msra.mxu0 %v45
  %667 = vmatpush.msra.mxu0 %v43
  %668 = vmatpush.msra.mxu0 %v41
  %669 = vmatpush.msra.mxu0 %v39
  %670 = vmatpush.msra.mxu0 %v37
  %671 = vmatpush.msra.mxu0 %v35
  %672 = vmatpush.msra.mxu0 %v33
  %673 = vmatpush.msra.mxu0 %v31
  %674 = vmatpush.msra.mxu0 %v29
  %675 = vmatmul.f32.gmra.mxu0 %v611
  %v676 = vpop.f32.mrf.mxu0
  %v677 = vadd.f32 0.0, %v676
  %678 = vdwg.mxu0
  %679 = vmatpush.msra.mxu0 %v91
  %680 = vmatpush.msra.mxu0 %v89
  %681 = vmatpush.msra.mxu0 %v87
  %682 = vmatpush.msra.mxu0 %v85
  %683 = vmatpush.msra.mxu0 %v83
  %684 = vmatpush.msra.mxu0 %v81
  %685 = vmatpush.msra.mxu0 %v79
  %686 = vmatpush.msra.mxu0 %v77
  %687 = vmatpush.msra.mxu0 %v75
  %688 = vmatpush.msra.mxu0 %v73
  %689 = vmatpush.msra.mxu0 %v71
  %690 = vmatpush.msra.mxu0 %v69
  %691 = vmatpush.msra.mxu0 %v67
  %692 = vmatpush.msra.mxu0 %v65
  %693 = vmatpush.msra.mxu0 %v63
  %694 = vmatpush.msra.mxu0 %v61
  %695 = vmatmul.f32.gmra.mxu0 %v618
  %v696 = vpop.f32.mrf.mxu0
  %v697 = vadd.f32 %v677, %v696
  %698 = vdwg.mxu0
  %v699 = vmul.f32 %v657, 0.001953125
  %v700 = vmul.f32 %v697, 0.001953125
  %v701 = vadd.f32 %v699, 1e-05
  %v702 = vadd.f32 %v700, 1e-05
  %v703 = vrsqrt.pop %v701
  %v704 = vmul.f32 %v703, %v701
  %v705 = vmul.f32 %v704, %v703
  %v706 = vmul.f32 0.5, %v705
  %v707 = vsub.f32 1.5, %v706
  %v708 = vmul.f32 %v703, %v707
  %vm709 = vweird.f32 %v701
  %vm710 = vweird.f32 %v703
  %vm711 = vmor %vm709, %vm710
  %v712 = vsel %vm711, %v703, %v708
  %v713 = vrsqrt.pop %v702
  %v714 = vmul.f32 %v713, %v702
  %v715 = vmul.f32 %v714, %v713
  %v716 = vmul.f32 0.5, %v715
  %v717 = vsub.f32 1.5, %v716
  %v718 = vmul.f32 %v713, %v717
  %vm719 = vweird.f32 %v702
  %vm720 = vweird.f32 %v713
  %vm721 = vmor %vm719, %vm720
  %v722 = vsel %vm721, %v713, %v718
  %v723 = vmul.f32 %v92, %v712
  %v724 = vmul.f32 %v93, %v722
  %v725 = vperm.slane %v723, 0
  %v726 = vperm.slane %v724, 0
  %v727 = vmul.f32 %v597, %v725
  %v728 = vmul.f32 %v598, %v726
  %v729 = vmul.f32 %v599, %v725
  %v730 = vmul.f32 %v600, %v726
  %v731 = vperm.slane %v92, 1
  %v732 = vperm.slane %v93, 1
  %v733 = vadd.f32 %v727, %v731
  %v734 = vadd.f32 %v728, %v732
  %v735 = vadd.f32 %v729, %v731
  %v736 = vadd.f32 %v730, %v732
  %v737 = vmax.f32 %v733, 0.0
  %v738 = vmax.f32 %v734, 0.0
  %v739 = vmax.f32 %v735, 0.0
  %v740 = vmax.f32 %v736, 0.0
  %v741 = vld [vmem:[%s3] sm:$0xff]
  %v742 = vld [vmem:[%s3 + $0x8] sm:$0xff]
  %v743 = vld [vmem:[%s3 + $0x10] sm:$0xff]
  %v744 = vld [vmem:[%s3 + $0x18] sm:$0xff]
  %v745 = vld [vmem:[%s3 + $0x20] sm:$0xff]
  %v746 = vld [vmem:[%s3 + $0x28] sm:$0xff]
  %v747 = vld [vmem:[%s3 + $0x30] sm:$0xff]
  %v748 = vld [vmem:[%s3 + $0x38] sm:$0xff]
  %v749 = vld [vmem:[%s3 + $0x40] sm:$0xff]
  %v750 = vld [vmem:[%s3 + $0x48] sm:$0xff]
  %v751 = vld [vmem:[%s3 + $0x50] sm:$0xff]
  %v752 = vld [vmem:[%s3 + $0x58] sm:$0xff]
  %v753 = vld [vmem:[%s3 + $0x60] sm:$0xff]
  %v754 = vld [vmem:[%s3 + $0x68] sm:$0xff]
  %v755 = vld [vmem:[%s3 + $0x70] sm:$0xff]
  %v756 = vld [vmem:[%s3 + $0x78] sm:$0xff]
  %v757 = vld [vmem:[%s3 + $0x80] sm:$0xff]
  %v758 = vld [vmem:[%s3 + $0x88] sm:$0xff]
  %v759 = vld [vmem:[%s3 + $0x90] sm:$0xff]
  %v760 = vld [vmem:[%s3 + $0x98] sm:$0xff]
  %v761 = vld [vmem:[%s3 + $0xa0] sm:$0xff]
  %v762 = vld [vmem:[%s3 + $0xa8] sm:$0xff]
  %v763 = vld [vmem:[%s3 + $0xb0] sm:$0xff]
  %v764 = vld [vmem:[%s3 + $0xb8] sm:$0xff]
  %v765 = vld [vmem:[%s3 + $0xc0] sm:$0xff]
  %v766 = vld [vmem:[%s3 + $0xc8] sm:$0xff]
  %v767 = vld [vmem:[%s3 + $0xd0] sm:$0xff]
  %v768 = vld [vmem:[%s3 + $0xd8] sm:$0xff]
  %v769 = vld [vmem:[%s3 + $0xe0] sm:$0xff]
  %v770 = vld [vmem:[%s3 + $0xe8] sm:$0xff]
  %v771 = vld [vmem:[%s3 + $0xf0] sm:$0xff]
  %v772 = vld [vmem:[%s3 + $0xf8] sm:$0xff]
  %v773 = vld [vmem:[%s3 + $0x100] sm:$0xff]
  %v774 = vld [vmem:[%s3 + $0x108] sm:$0xff]
  %v775 = vld [vmem:[%s3 + $0x110] sm:$0xff]
  %v776 = vld [vmem:[%s3 + $0x118] sm:$0xff]
  %v777 = vld [vmem:[%s3 + $0x120] sm:$0xff]
  %v778 = vld [vmem:[%s3 + $0x128] sm:$0xff]
  %v779 = vld [vmem:[%s3 + $0x130] sm:$0xff]
  %v780 = vld [vmem:[%s3 + $0x138] sm:$0xff]
  %v781 = vld [vmem:[%s3 + $0x140] sm:$0xff]
  %v782 = vld [vmem:[%s3 + $0x148] sm:$0xff]
  %v783 = vld [vmem:[%s3 + $0x150] sm:$0xff]
  %v784 = vld [vmem:[%s3 + $0x158] sm:$0xff]
  %v785 = vld [vmem:[%s3 + $0x160] sm:$0xff]
  %v786 = vld [vmem:[%s3 + $0x168] sm:$0xff]
  %v787 = vld [vmem:[%s3 + $0x170] sm:$0xff]
  %v788 = vld [vmem:[%s3 + $0x178] sm:$0xff]
  %v789 = vld [vmem:[%s3 + $0x180] sm:$0xff]
  %v790 = vld [vmem:[%s3 + $0x188] sm:$0xff]
  %v791 = vld [vmem:[%s3 + $0x190] sm:$0xff]
  %v792 = vld [vmem:[%s3 + $0x198] sm:$0xff]
  %v793 = vld [vmem:[%s3 + $0x1a0] sm:$0xff]
  %v794 = vld [vmem:[%s3 + $0x1a8] sm:$0xff]
  %v795 = vld [vmem:[%s3 + $0x1b0] sm:$0xff]
  %v796 = vld [vmem:[%s3 + $0x1b8] sm:$0xff]
  %v797 = vld [vmem:[%s3 + $0x1c0] sm:$0xff]
  %v798 = vld [vmem:[%s3 + $0x1c8] sm:$0xff]
  %v799 = vld [vmem:[%s3 + $0x1d0] sm:$0xff]
  %v800 = vld [vmem:[%s3 + $0x1d8] sm:$0xff]
  %v801 = vld [vmem:[%s3 + $0x1e0] sm:$0xff]
  %v802 = vld [vmem:[%s3 + $0x1e8] sm:$0xff]
  %v803 = vld [vmem:[%s3 + $0x1f0] sm:$0xff]
  %v804 = vld [vmem:[%s3 + $0x1f8] sm:$0xff]
  %805 = vmatpush.msra.mxu0 %v771
  %806 = vmatpush.msra.mxu0 %v769
  %807 = vmatpush.msra.mxu0 %v767
  %808 = vmatpush.msra.mxu0 %v765
  %809 = vmatpush.msra.mxu0 %v763
  %810 = vmatpush.msra.mxu0 %v761
  %811 = vmatpush.msra.mxu0 %v759
  %812 = vmatpush.msra.mxu0 %v757
  %813 = vmatpush.msra.mxu0 %v755
  %814 = vmatpush.msra.mxu0 %v753
  %815 = vmatpush.msra.mxu0 %v751
  %816 = vmatpush.msra.mxu0 %v749
  %817 = vmatpush.msra.mxu0 %v747
  %818 = vmatpush.msra.mxu0 %v745
  %819 = vmatpush.msra.mxu0 %v743
  %820 = vmatpush.msra.mxu0 %v741
  %821 = vmatmul.f32.gmra.mxu0 %v737
  %v822 = vpop.f32.mrf.mxu0
  %v823 = vadd.f32 0.0, %v822
  %824 = vmatmul.f32.gmra.mxu0 %v739
  %v825 = vpop.f32.mrf.mxu0
  %v826 = vadd.f32 0.0, %v825
  %827 = vdwg.mxu0
  %828 = vmatpush.msra.mxu0 %v803
  %829 = vmatpush.msra.mxu0 %v801
  %830 = vmatpush.msra.mxu0 %v799
  %831 = vmatpush.msra.mxu0 %v797
  %832 = vmatpush.msra.mxu0 %v795
  %833 = vmatpush.msra.mxu0 %v793
  %834 = vmatpush.msra.mxu0 %v791
  %835 = vmatpush.msra.mxu0 %v789
  %836 = vmatpush.msra.mxu0 %v787
  %837 = vmatpush.msra.mxu0 %v785
  %838 = vmatpush.msra.mxu0 %v783
  %839 = vmatpush.msra.mxu0 %v781
  %840 = vmatpush.msra.mxu0 %v779
  %841 = vmatpush.msra.mxu0 %v777
  %842 = vmatpush.msra.mxu0 %v775
  %843 = vmatpush.msra.mxu0 %v773
  %844 = vmatmul.f32.gmra.mxu0 %v738
  %v845 = vpop.f32.mrf.mxu0
  %v846 = vadd.f32 %v823, %v845
  %847 = vmatmul.f32.gmra.mxu0 %v740
  %v848 = vpop.f32.mrf.mxu0
  %v849 = vadd.f32 %v826, %v848
  %850 = vdwg.mxu0
  %851 = vmatpush.msra.mxu0 %v772
  %852 = vmatpush.msra.mxu0 %v770
  %853 = vmatpush.msra.mxu0 %v768
  %854 = vmatpush.msra.mxu0 %v766
  %855 = vmatpush.msra.mxu0 %v764
  %856 = vmatpush.msra.mxu0 %v762
  %857 = vmatpush.msra.mxu0 %v760
  %858 = vmatpush.msra.mxu0 %v758
  %859 = vmatpush.msra.mxu0 %v756
  %860 = vmatpush.msra.mxu0 %v754
  %861 = vmatpush.msra.mxu0 %v752
  %862 = vmatpush.msra.mxu0 %v750
  %863 = vmatpush.msra.mxu0 %v748
  %864 = vmatpush.msra.mxu0 %v746
  %865 = vmatpush.msra.mxu0 %v744
  %866 = vmatpush.msra.mxu0 %v742
  %867 = vmatmul.f32.gmra.mxu0 %v737
  %v868 = vpop.f32.mrf.mxu0
  %v869 = vadd.f32 0.0, %v868
  %870 = vmatmul.f32.gmra.mxu0 %v739
  %v871 = vpop.f32.mrf.mxu0
  %v872 = vadd.f32 0.0, %v871
  %873 = vdwg.mxu0
  %874 = vmatpush.msra.mxu0 %v804
  %875 = vmatpush.msra.mxu0 %v802
  %876 = vmatpush.msra.mxu0 %v800
  %877 = vmatpush.msra.mxu0 %v798
  %878 = vmatpush.msra.mxu0 %v796
  %879 = vmatpush.msra.mxu0 %v794
  %880 = vmatpush.msra.mxu0 %v792
  %881 = vmatpush.msra.mxu0 %v790
  %882 = vmatpush.msra.mxu0 %v788
  %883 = vmatpush.msra.mxu0 %v786
  %884 = vmatpush.msra.mxu0 %v784
  %885 = vmatpush.msra.mxu0 %v782
  %886 = vmatpush.msra.mxu0 %v780
  %887 = vmatpush.msra.mxu0 %v778
  %888 = vmatpush.msra.mxu0 %v776
  %889 = vmatpush.msra.mxu0 %v774
  %890 = vmatmul.f32.gmra.mxu0 %v738
  %v891 = vpop.f32.mrf.mxu0
  %v892 = vadd.f32 %v869, %v891
  %893 = vmatmul.f32.gmra.mxu0 %v740
  %v894 = vpop.f32.mrf.mxu0
  %v895 = vadd.f32 %v872, %v894
  %896 = vdwg.mxu0
  %s897 = scalar_lea.vmem %s3, 512
  %v898 = vld [vmem:[%s897] sm:$0xff]
  %v899 = vld [vmem:[%s897 + $0x8] sm:$0xff]
  %v900 = vld [vmem:[%s897 + $0x10] sm:$0xff]
  %v901 = vld [vmem:[%s897 + $0x18] sm:$0xff]
  %v902 = vld [vmem:[%s897 + $0x20] sm:$0xff]
  %v903 = vld [vmem:[%s897 + $0x28] sm:$0xff]
  %v904 = vld [vmem:[%s897 + $0x30] sm:$0xff]
  %v905 = vld [vmem:[%s897 + $0x38] sm:$0xff]
  %v906 = vld [vmem:[%s897 + $0x40] sm:$0xff]
  %v907 = vld [vmem:[%s897 + $0x48] sm:$0xff]
  %v908 = vld [vmem:[%s897 + $0x50] sm:$0xff]
  %v909 = vld [vmem:[%s897 + $0x58] sm:$0xff]
  %v910 = vld [vmem:[%s897 + $0x60] sm:$0xff]
  %v911 = vld [vmem:[%s897 + $0x68] sm:$0xff]
  %v912 = vld [vmem:[%s897 + $0x70] sm:$0xff]
  %v913 = vld [vmem:[%s897 + $0x78] sm:$0xff]
  %v914 = vld [vmem:[%s897 + $0x80] sm:$0xff]
  %v915 = vld [vmem:[%s897 + $0x88] sm:$0xff]
  %v916 = vld [vmem:[%s897 + $0x90] sm:$0xff]
  %v917 = vld [vmem:[%s897 + $0x98] sm:$0xff]
  %v918 = vld [vmem:[%s897 + $0xa0] sm:$0xff]
  %v919 = vld [vmem:[%s897 + $0xa8] sm:$0xff]
  %v920 = vld [vmem:[%s897 + $0xb0] sm:$0xff]
  %v921 = vld [vmem:[%s897 + $0xb8] sm:$0xff]
  %v922 = vld [vmem:[%s897 + $0xc0] sm:$0xff]
  %v923 = vld [vmem:[%s897 + $0xc8] sm:$0xff]
  %v924 = vld [vmem:[%s897 + $0xd0] sm:$0xff]
  %v925 = vld [vmem:[%s897 + $0xd8] sm:$0xff]
  %v926 = vld [vmem:[%s897 + $0xe0] sm:$0xff]
  %v927 = vld [vmem:[%s897 + $0xe8] sm:$0xff]
  %v928 = vld [vmem:[%s897 + $0xf0] sm:$0xff]
  %v929 = vld [vmem:[%s897 + $0xf8] sm:$0xff]
  %v930 = vld [vmem:[%s897 + $0x100] sm:$0xff]
  %v931 = vld [vmem:[%s897 + $0x108] sm:$0xff]
  %v932 = vld [vmem:[%s897 + $0x110] sm:$0xff]
  %v933 = vld [vmem:[%s897 + $0x118] sm:$0xff]
  %v934 = vld [vmem:[%s897 + $0x120] sm:$0xff]
  %v935 = vld [vmem:[%s897 + $0x128] sm:$0xff]
  %v936 = vld [vmem:[%s897 + $0x130] sm:$0xff]
  %v937 = vld [vmem:[%s897 + $0x138] sm:$0xff]
  %v938 = vld [vmem:[%s897 + $0x140] sm:$0xff]
  %v939 = vld [vmem:[%s897 + $0x148] sm:$0xff]
  %v940 = vld [vmem:[%s897 + $0x150] sm:$0xff]
  %v941 = vld [vmem:[%s897 + $0x158] sm:$0xff]
  %v942 = vld [vmem:[%s897 + $0x160] sm:$0xff]
  %v943 = vld [vmem:[%s897 + $0x168] sm:$0xff]
  %v944 = vld [vmem:[%s897 + $0x170] sm:$0xff]
  %v945 = vld [vmem:[%s897 + $0x178] sm:$0xff]
  %v946 = vld [vmem:[%s897 + $0x180] sm:$0xff]
  %v947 = vld [vmem:[%s897 + $0x188] sm:$0xff]
  %v948 = vld [vmem:[%s897 + $0x190] sm:$0xff]
  %v949 = vld [vmem:[%s897 + $0x198] sm:$0xff]
  %v950 = vld [vmem:[%s897 + $0x1a0] sm:$0xff]
  %v951 = vld [vmem:[%s897 + $0x1a8] sm:$0xff]
  %v952 = vld [vmem:[%s897 + $0x1b0] sm:$0xff]
  %v953 = vld [vmem:[%s897 + $0x1b8] sm:$0xff]
  %v954 = vld [vmem:[%s897 + $0x1c0] sm:$0xff]
  %v955 = vld [vmem:[%s897 + $0x1c8] sm:$0xff]
  %v956 = vld [vmem:[%s897 + $0x1d0] sm:$0xff]
  %v957 = vld [vmem:[%s897 + $0x1d8] sm:$0xff]
  %v958 = vld [vmem:[%s897 + $0x1e0] sm:$0xff]
  %v959 = vld [vmem:[%s897 + $0x1e8] sm:$0xff]
  %v960 = vld [vmem:[%s897 + $0x1f0] sm:$0xff]
  %v961 = vld [vmem:[%s897 + $0x1f8] sm:$0xff]
  %962 = vmatpush.msra.mxu0 %v928
  %963 = vmatpush.msra.mxu0 %v926
  %964 = vmatpush.msra.mxu0 %v924
  %965 = vmatpush.msra.mxu0 %v922
  %966 = vmatpush.msra.mxu0 %v920
  %967 = vmatpush.msra.mxu0 %v918
  %968 = vmatpush.msra.mxu0 %v916
  %969 = vmatpush.msra.mxu0 %v914
  %970 = vmatpush.msra.mxu0 %v912
  %971 = vmatpush.msra.mxu0 %v910
  %972 = vmatpush.msra.mxu0 %v908
  %973 = vmatpush.msra.mxu0 %v906
  %974 = vmatpush.msra.mxu0 %v904
  %975 = vmatpush.msra.mxu0 %v902
  %976 = vmatpush.msra.mxu0 %v900
  %977 = vmatpush.msra.mxu0 %v898
  %978 = vmatmul.f32.gmra.mxu0 %v737
  %v979 = vpop.f32.mrf.mxu0
  %v980 = vadd.f32 0.0, %v979
  %981 = vmatmul.f32.gmra.mxu0 %v739
  %v982 = vpop.f32.mrf.mxu0
  %v983 = vadd.f32 0.0, %v982
  %984 = vdwg.mxu0
  %985 = vmatpush.msra.mxu0 %v960
  %986 = vmatpush.msra.mxu0 %v958
  %987 = vmatpush.msra.mxu0 %v956
  %988 = vmatpush.msra.mxu0 %v954
  %989 = vmatpush.msra.mxu0 %v952
  %990 = vmatpush.msra.mxu0 %v950
  %991 = vmatpush.msra.mxu0 %v948
  %992 = vmatpush.msra.mxu0 %v946
  %993 = vmatpush.msra.mxu0 %v944
  %994 = vmatpush.msra.mxu0 %v942
  %995 = vmatpush.msra.mxu0 %v940
  %996 = vmatpush.msra.mxu0 %v938
  %997 = vmatpush.msra.mxu0 %v936
  %998 = vmatpush.msra.mxu0 %v934
  %999 = vmatpush.msra.mxu0 %v932
  %1000 = vmatpush.msra.mxu0 %v930
  %1001 = vmatmul.f32.gmra.mxu0 %v738
  %v1002 = vpop.f32.mrf.mxu0
  %v1003 = vadd.f32 %v980, %v1002
  %1004 = vmatmul.f32.gmra.mxu0 %v740
  %v1005 = vpop.f32.mrf.mxu0
  %v1006 = vadd.f32 %v983, %v1005
  %1007 = vdwg.mxu0
  %1008 = vmatpush.msra.mxu0 %v929
  %1009 = vmatpush.msra.mxu0 %v927
  %1010 = vmatpush.msra.mxu0 %v925
  %1011 = vmatpush.msra.mxu0 %v923
  %1012 = vmatpush.msra.mxu0 %v921
  %1013 = vmatpush.msra.mxu0 %v919
  %1014 = vmatpush.msra.mxu0 %v917
  %1015 = vmatpush.msra.mxu0 %v915
  %1016 = vmatpush.msra.mxu0 %v913
  %1017 = vmatpush.msra.mxu0 %v911
  %1018 = vmatpush.msra.mxu0 %v909
  %1019 = vmatpush.msra.mxu0 %v907
  %1020 = vmatpush.msra.mxu0 %v905
  %1021 = vmatpush.msra.mxu0 %v903
  %1022 = vmatpush.msra.mxu0 %v901
  %1023 = vmatpush.msra.mxu0 %v899
  %1024 = vmatmul.f32.gmra.mxu0 %v737
  %v1025 = vpop.f32.mrf.mxu0
  %v1026 = vadd.f32 0.0, %v1025
  %1027 = vmatmul.f32.gmra.mxu0 %v739
  %v1028 = vpop.f32.mrf.mxu0
  %v1029 = vadd.f32 0.0, %v1028
  %1030 = vdwg.mxu0
  %1031 = vmatpush.msra.mxu0 %v961
  %1032 = vmatpush.msra.mxu0 %v959
  %1033 = vmatpush.msra.mxu0 %v957
  %1034 = vmatpush.msra.mxu0 %v955
  %1035 = vmatpush.msra.mxu0 %v953
  %1036 = vmatpush.msra.mxu0 %v951
  %1037 = vmatpush.msra.mxu0 %v949
  %1038 = vmatpush.msra.mxu0 %v947
  %1039 = vmatpush.msra.mxu0 %v945
  %1040 = vmatpush.msra.mxu0 %v943
  %1041 = vmatpush.msra.mxu0 %v941
  %1042 = vmatpush.msra.mxu0 %v939
  %1043 = vmatpush.msra.mxu0 %v937
  %1044 = vmatpush.msra.mxu0 %v935
  %1045 = vmatpush.msra.mxu0 %v933
  %1046 = vmatpush.msra.mxu0 %v931
  %1047 = vmatmul.f32.gmra.mxu0 %v738
  %v1048 = vpop.f32.mrf.mxu0
  %v1049 = vadd.f32 %v1026, %v1048
  %1050 = vmatmul.f32.gmra.mxu0 %v740
  %v1051 = vpop.f32.mrf.mxu0
  %v1052 = vadd.f32 %v1029, %v1051
  %1053 = vdwg.mxu0
  %1054 = vmatpush.msra.mxu0 0.0
  %1055 = vmatpush.msra.mxu0 0.0
  %1056 = vmatpush.msra.mxu0 0.0
  %1057 = vmatpush.msra.mxu0 0.0
  %1058 = vmatpush.msra.mxu0 0.0
  %1059 = vmatpush.msra.mxu0 0.0
  %1060 = vmatpush.msra.mxu0 0.0
  %1061 = vmatpush.msra.mxu0 0.0
  %1062 = vmatpush.msra.mxu0 0.0
  %1063 = vmatpush.msra.mxu0 0.0
  %1064 = vmatpush.msra.mxu0 0.0
  %1065 = vmatpush.msra.mxu0 0.0
  %1066 = vmatpush.msra.mxu0 0.0
  %1067 = vmatpush.msra.mxu0 0.0
  %1068 = vmatpush.msra.mxu0 %v1006
  %1069 = vmatpush.msra.mxu0 %v1003
  %1070 = vmatmul.f32.gmra.mxu0 %v258
  %v1071 = vpop.f32.mrf.mxu0
  %v1072 = vadd.f32 0.0, %v1071
  %1073 = vmatmul.f32.gmra.mxu0 %v261
  %v1074 = vpop.f32.mrf.mxu0
  %v1075 = vadd.f32 0.0, %v1074
  %1076 = vdwg.mxu0
  %1077 = vmatpush.msra.mxu0 0.0
  %1078 = vmatpush.msra.mxu0 0.0
  %1079 = vmatpush.msra.mxu0 0.0
  %1080 = vmatpush.msra.mxu0 0.0
  %1081 = vmatpush.msra.mxu0 0.0
  %1082 = vmatpush.msra.mxu0 0.0
  %1083 = vmatpush.msra.mxu0 0.0
  %1084 = vmatpush.msra.mxu0 0.0
  %1085 = vmatpush.msra.mxu0 0.0
  %1086 = vmatpush.msra.mxu0 0.0
  %1087 = vmatpush.msra.mxu0 0.0
  %1088 = vmatpush.msra.mxu0 0.0
  %1089 = vmatpush.msra.mxu0 0.0
  %1090 = vmatpush.msra.mxu0 0.0
  %1091 = vmatpush.msra.mxu0 %v1052
  %1092 = vmatpush.msra.mxu0 %v1049
  %1093 = vmatmul.f32.gmra.mxu0 %v258
  %v1094 = vpop.f32.mrf.mxu0
  %v1095 = vadd.f32 0.0, %v1094
  %1096 = vmatmul.f32.gmra.mxu0 %v261
  %v1097 = vpop.f32.mrf.mxu0
  %v1098 = vadd.f32 0.0, %v1097
  %1099 = vdwg.mxu0
  %1100 = vmatpush.msra.mxu0 0.0
  %1101 = vmatpush.msra.mxu0 0.0
  %1102 = vmatpush.msra.mxu0 0.0
  %1103 = vmatpush.msra.mxu0 0.0
  %1104 = vmatpush.msra.mxu0 0.0
  %1105 = vmatpush.msra.mxu0 0.0
  %1106 = vmatpush.msra.mxu0 0.0
  %1107 = vmatpush.msra.mxu0 0.0
  %1108 = vmatpush.msra.mxu0 0.0
  %1109 = vmatpush.msra.mxu0 0.0
  %1110 = vmatpush.msra.mxu0 0.0
  %1111 = vmatpush.msra.mxu0 0.0
  %1112 = vmatpush.msra.mxu0 0.0
  %1113 = vmatpush.msra.mxu0 0.0
  %1114 = vmatpush.msra.mxu0 %v849
  %1115 = vmatpush.msra.mxu0 %v846
  %1116 = vmatmul.f32.gmra.mxu0 %v310
  %v1117 = vpop.f32.mrf.mxu0
  %v1118 = vadd.f32 %v1072, %v1117
  %1119 = vmatmul.f32.gmra.mxu0 %v313
  %v1120 = vpop.f32.mrf.mxu0
  %v1121 = vadd.f32 %v1075, %v1120
  %1122 = vdwg.mxu0
  %1123 = vmatpush.msra.mxu0 0.0
  %1124 = vmatpush.msra.mxu0 0.0
  %1125 = vmatpush.msra.mxu0 0.0
  %1126 = vmatpush.msra.mxu0 0.0
  %1127 = vmatpush.msra.mxu0 0.0
  %1128 = vmatpush.msra.mxu0 0.0
  %1129 = vmatpush.msra.mxu0 0.0
  %1130 = vmatpush.msra.mxu0 0.0
  %1131 = vmatpush.msra.mxu0 0.0
  %1132 = vmatpush.msra.mxu0 0.0
  %1133 = vmatpush.msra.mxu0 0.0
  %1134 = vmatpush.msra.mxu0 0.0
  %1135 = vmatpush.msra.mxu0 0.0
  %1136 = vmatpush.msra.mxu0 0.0
  %1137 = vmatpush.msra.mxu0 %v895
  %1138 = vmatpush.msra.mxu0 %v892
  %1139 = vmatmul.f32.gmra.mxu0 %v310
  %v1140 = vpop.f32.mrf.mxu0
  %v1141 = vadd.f32 %v1095, %v1140
  %1142 = vmatmul.f32.gmra.mxu0 %v313
  %v1143 = vpop.f32.mrf.mxu0
  %v1144 = vadd.f32 %v1098, %v1143
  %1145 = vdwg.mxu0
  %s1146 = scalar_lea.vmem %s3, 1024
  %v1147 = vld [vmem:[%s1146] sm:$0xff]
  %v1148 = vld [vmem:[%s1146 + $0x8] sm:$0xff]
  %v1149 = vld [vmem:[%s1146 + $0x10] sm:$0xff]
  %v1150 = vld [vmem:[%s1146 + $0x18] sm:$0xff]
  %v1151 = vld [vmem:[%s1146 + $0x20] sm:$0xff]
  %v1152 = vld [vmem:[%s1146 + $0x28] sm:$0xff]
  %v1153 = vld [vmem:[%s1146 + $0x30] sm:$0xff]
  %v1154 = vld [vmem:[%s1146 + $0x38] sm:$0xff]
  %v1155 = vld [vmem:[%s1146 + $0x40] sm:$0xff]
  %v1156 = vld [vmem:[%s1146 + $0x48] sm:$0xff]
  %v1157 = vld [vmem:[%s1146 + $0x50] sm:$0xff]
  %v1158 = vld [vmem:[%s1146 + $0x58] sm:$0xff]
  %v1159 = vld [vmem:[%s1146 + $0x60] sm:$0xff]
  %v1160 = vld [vmem:[%s1146 + $0x68] sm:$0xff]
  %v1161 = vld [vmem:[%s1146 + $0x70] sm:$0xff]
  %v1162 = vld [vmem:[%s1146 + $0x78] sm:$0xff]
  %v1163 = vld [vmem:[%s1146 + $0x80] sm:$0xff]
  %v1164 = vld [vmem:[%s1146 + $0x88] sm:$0xff]
  %v1165 = vld [vmem:[%s1146 + $0x90] sm:$0xff]
  %v1166 = vld [vmem:[%s1146 + $0x98] sm:$0xff]
  %v1167 = vld [vmem:[%s1146 + $0xa0] sm:$0xff]
  %v1168 = vld [vmem:[%s1146 + $0xa8] sm:$0xff]
  %v1169 = vld [vmem:[%s1146 + $0xb0] sm:$0xff]
  %v1170 = vld [vmem:[%s1146 + $0xb8] sm:$0xff]
  %v1171 = vld [vmem:[%s1146 + $0xc0] sm:$0xff]
  %v1172 = vld [vmem:[%s1146 + $0xc8] sm:$0xff]
  %v1173 = vld [vmem:[%s1146 + $0xd0] sm:$0xff]
  %v1174 = vld [vmem:[%s1146 + $0xd8] sm:$0xff]
  %v1175 = vld [vmem:[%s1146 + $0xe0] sm:$0xff]
  %v1176 = vld [vmem:[%s1146 + $0xe8] sm:$0xff]
  %v1177 = vld [vmem:[%s1146 + $0xf0] sm:$0xff]
  %v1178 = vld [vmem:[%s1146 + $0xf8] sm:$0xff]
  %v1179 = vld [vmem:[%s1146 + $0x100] sm:$0xff]
  %v1180 = vld [vmem:[%s1146 + $0x108] sm:$0xff]
  %v1181 = vld [vmem:[%s1146 + $0x110] sm:$0xff]
  %v1182 = vld [vmem:[%s1146 + $0x118] sm:$0xff]
  %v1183 = vld [vmem:[%s1146 + $0x120] sm:$0xff]
  %v1184 = vld [vmem:[%s1146 + $0x128] sm:$0xff]
  %v1185 = vld [vmem:[%s1146 + $0x130] sm:$0xff]
  %v1186 = vld [vmem:[%s1146 + $0x138] sm:$0xff]
  %v1187 = vld [vmem:[%s1146 + $0x140] sm:$0xff]
  %v1188 = vld [vmem:[%s1146 + $0x148] sm:$0xff]
  %v1189 = vld [vmem:[%s1146 + $0x150] sm:$0xff]
  %v1190 = vld [vmem:[%s1146 + $0x158] sm:$0xff]
  %v1191 = vld [vmem:[%s1146 + $0x160] sm:$0xff]
  %v1192 = vld [vmem:[%s1146 + $0x168] sm:$0xff]
  %v1193 = vld [vmem:[%s1146 + $0x170] sm:$0xff]
  %v1194 = vld [vmem:[%s1146 + $0x178] sm:$0xff]
  %v1195 = vld [vmem:[%s1146 + $0x180] sm:$0xff]
  %v1196 = vld [vmem:[%s1146 + $0x188] sm:$0xff]
  %v1197 = vld [vmem:[%s1146 + $0x190] sm:$0xff]
  %v1198 = vld [vmem:[%s1146 + $0x198] sm:$0xff]
  %v1199 = vld [vmem:[%s1146 + $0x1a0] sm:$0xff]
  %v1200 = vld [vmem:[%s1146 + $0x1a8] sm:$0xff]
  %v1201 = vld [vmem:[%s1146 + $0x1b0] sm:$0xff]
  %v1202 = vld [vmem:[%s1146 + $0x1b8] sm:$0xff]
  %v1203 = vld [vmem:[%s1146 + $0x1c0] sm:$0xff]
  %v1204 = vld [vmem:[%s1146 + $0x1c8] sm:$0xff]
  %v1205 = vld [vmem:[%s1146 + $0x1d0] sm:$0xff]
  %v1206 = vld [vmem:[%s1146 + $0x1d8] sm:$0xff]
  %v1207 = vld [vmem:[%s1146 + $0x1e0] sm:$0xff]
  %v1208 = vld [vmem:[%s1146 + $0x1e8] sm:$0xff]
  %v1209 = vld [vmem:[%s1146 + $0x1f0] sm:$0xff]
  %v1210 = vld [vmem:[%s1146 + $0x1f8] sm:$0xff]
  %1211 = vmatpush.msra.mxu0 %v1177
  %1212 = vmatpush.msra.mxu0 %v1175
  %1213 = vmatpush.msra.mxu0 %v1173
  %1214 = vmatpush.msra.mxu0 %v1171
  %1215 = vmatpush.msra.mxu0 %v1169
  %1216 = vmatpush.msra.mxu0 %v1167
  %1217 = vmatpush.msra.mxu0 %v1165
  %1218 = vmatpush.msra.mxu0 %v1163
  %1219 = vmatpush.msra.mxu0 %v1161
  %1220 = vmatpush.msra.mxu0 %v1159
  %1221 = vmatpush.msra.mxu0 %v1157
  %1222 = vmatpush.msra.mxu0 %v1155
  %1223 = vmatpush.msra.mxu0 %v1153
  %1224 = vmatpush.msra.mxu0 %v1151
  %1225 = vmatpush.msra.mxu0 %v1149
  %1226 = vmatpush.msra.mxu0 %v1147
  %1227 = vmatmul.f32.gmra.mxu0 %v737
  %v1228 = vpop.f32.mrf.mxu0
  %v1229 = vadd.f32 0.0, %v1228
  %1230 = vmatmul.f32.gmra.mxu0 %v739
  %v1231 = vpop.f32.mrf.mxu0
  %v1232 = vadd.f32 0.0, %v1231
  %1233 = vdwg.mxu0
  %1234 = vmatpush.msra.mxu0 %v1209
  %1235 = vmatpush.msra.mxu0 %v1207
  %1236 = vmatpush.msra.mxu0 %v1205
  %1237 = vmatpush.msra.mxu0 %v1203
  %1238 = vmatpush.msra.mxu0 %v1201
  %1239 = vmatpush.msra.mxu0 %v1199
  %1240 = vmatpush.msra.mxu0 %v1197
  %1241 = vmatpush.msra.mxu0 %v1195
  %1242 = vmatpush.msra.mxu0 %v1193
  %1243 = vmatpush.msra.mxu0 %v1191
  %1244 = vmatpush.msra.mxu0 %v1189
  %1245 = vmatpush.msra.mxu0 %v1187
  %1246 = vmatpush.msra.mxu0 %v1185
  %1247 = vmatpush.msra.mxu0 %v1183
  %1248 = vmatpush.msra.mxu0 %v1181
  %1249 = vmatpush.msra.mxu0 %v1179
  %1250 = vmatmul.f32.gmra.mxu0 %v738
  %v1251 = vpop.f32.mrf.mxu0
  %v1252 = vadd.f32 %v1229, %v1251
  %1253 = vmatmul.f32.gmra.mxu0 %v740
  %v1254 = vpop.f32.mrf.mxu0
  %v1255 = vadd.f32 %v1232, %v1254
  %1256 = vdwg.mxu0
  %1257 = vmatpush.msra.mxu0 %v1178
  %1258 = vmatpush.msra.mxu0 %v1176
  %1259 = vmatpush.msra.mxu0 %v1174
  %1260 = vmatpush.msra.mxu0 %v1172
  %1261 = vmatpush.msra.mxu0 %v1170
  %1262 = vmatpush.msra.mxu0 %v1168
  %1263 = vmatpush.msra.mxu0 %v1166
  %1264 = vmatpush.msra.mxu0 %v1164
  %1265 = vmatpush.msra.mxu0 %v1162
  %1266 = vmatpush.msra.mxu0 %v1160
  %1267 = vmatpush.msra.mxu0 %v1158
  %1268 = vmatpush.msra.mxu0 %v1156
  %1269 = vmatpush.msra.mxu0 %v1154
  %1270 = vmatpush.msra.mxu0 %v1152
  %1271 = vmatpush.msra.mxu0 %v1150
  %1272 = vmatpush.msra.mxu0 %v1148
  %1273 = vmatmul.f32.gmra.mxu0 %v737
  %v1274 = vpop.f32.mrf.mxu0
  %v1275 = vadd.f32 0.0, %v1274
  %1276 = vmatmul.f32.gmra.mxu0 %v739
  %v1277 = vpop.f32.mrf.mxu0
  %v1278 = vadd.f32 0.0, %v1277
  %1279 = vdwg.mxu0
  %1280 = vmatpush.msra.mxu0 %v1210
  %1281 = vmatpush.msra.mxu0 %v1208
  %1282 = vmatpush.msra.mxu0 %v1206
  %1283 = vmatpush.msra.mxu0 %v1204
  %1284 = vmatpush.msra.mxu0 %v1202
  %1285 = vmatpush.msra.mxu0 %v1200
  %1286 = vmatpush.msra.mxu0 %v1198
  %1287 = vmatpush.msra.mxu0 %v1196
  %1288 = vmatpush.msra.mxu0 %v1194
  %1289 = vmatpush.msra.mxu0 %v1192
  %1290 = vmatpush.msra.mxu0 %v1190
  %1291 = vmatpush.msra.mxu0 %v1188
  %1292 = vmatpush.msra.mxu0 %v1186
  %1293 = vmatpush.msra.mxu0 %v1184
  %1294 = vmatpush.msra.mxu0 %v1182
  %1295 = vmatpush.msra.mxu0 %v1180
  %1296 = vmatmul.f32.gmra.mxu0 %v738
  %v1297 = vpop.f32.mrf.mxu0
  %v1298 = vadd.f32 %v1275, %v1297
  %1299 = vmatmul.f32.gmra.mxu0 %v740
  %v1300 = vpop.f32.mrf.mxu0
  %v1301 = vadd.f32 %v1278, %v1300
  %1302 = vdwg.mxu0
  %1303 = vmatpush.msra.mxu0 0.0
  %1304 = vmatpush.msra.mxu0 0.0
  %1305 = vmatpush.msra.mxu0 0.0
  %1306 = vmatpush.msra.mxu0 0.0
  %1307 = vmatpush.msra.mxu0 0.0
  %1308 = vmatpush.msra.mxu0 0.0
  %1309 = vmatpush.msra.mxu0 0.0
  %1310 = vmatpush.msra.mxu0 0.0
  %1311 = vmatpush.msra.mxu0 0.0
  %1312 = vmatpush.msra.mxu0 0.0
  %1313 = vmatpush.msra.mxu0 0.0
  %1314 = vmatpush.msra.mxu0 0.0
  %1315 = vmatpush.msra.mxu0 0.0
  %1316 = vmatpush.msra.mxu0 0.0
  %1317 = vmatpush.msra.mxu0 %v1255
  %1318 = vmatpush.msra.mxu0 %v1252
  %1319 = vmatmul.f32.gmra.mxu0 %v444
  %v1320 = vpop.f32.mrf.mxu0
  %v1321 = vadd.f32 0.0, %v1320
  %1322 = vmatmul.f32.gmra.mxu0 %v447
  %v1323 = vpop.f32.mrf.mxu0
  %v1324 = vadd.f32 0.0, %v1323
  %1325 = vdwg.mxu0
  %1326 = vmatpush.msra.mxu0 0.0
  %1327 = vmatpush.msra.mxu0 0.0
  %1328 = vmatpush.msra.mxu0 0.0
  %1329 = vmatpush.msra.mxu0 0.0
  %1330 = vmatpush.msra.mxu0 0.0
  %1331 = vmatpush.msra.mxu0 0.0
  %1332 = vmatpush.msra.mxu0 0.0
  %1333 = vmatpush.msra.mxu0 0.0
  %1334 = vmatpush.msra.mxu0 0.0
  %1335 = vmatpush.msra.mxu0 0.0
  %1336 = vmatpush.msra.mxu0 0.0
  %1337 = vmatpush.msra.mxu0 0.0
  %1338 = vmatpush.msra.mxu0 0.0
  %1339 = vmatpush.msra.mxu0 0.0
  %1340 = vmatpush.msra.mxu0 %v1301
  %1341 = vmatpush.msra.mxu0 %v1298
  %1342 = vmatmul.f32.gmra.mxu0 %v444
  %v1343 = vpop.f32.mrf.mxu0
  %v1344 = vadd.f32 0.0, %v1343
  %1345 = vmatmul.f32.gmra.mxu0 %v447
  %v1346 = vpop.f32.mrf.mxu0
  %v1347 = vadd.f32 0.0, %v1346
  %1348 = vdwg.mxu0
  %v1349 = vadd.f32 %v1118, %v1321
  %v1350 = vadd.f32 %v1141, %v1344
  %v1351 = vadd.f32 %v1121, %v1324
  %v1352 = vadd.f32 %v1144, %v1347
  %v1353 = vadd.f32 %v1349, %v1351
  %v1354 = vrot.slane %v1353, 4
  %v1355 = vadd.f32 %v1353, %v1354
  %v1356 = vrot.slane %v1355, 2
  %v1357 = vadd.f32 %v1355, %v1356
  %v1358 = vrot.slane %v1357, 1
  %v1359 = vadd.f32 %v1357, %v1358
  %v1360 = vadd.f32 %v1350, %v1352
  %v1361 = vrot.slane %v1360, 4
  %v1362 = vadd.f32 %v1360, %v1361
  %v1363 = vrot.slane %v1362, 2
  %v1364 = vadd.f32 %v1362, %v1363
  %v1365 = vrot.slane %v1364, 1
  %v1366 = vadd.f32 %v1364, %v1365
  %1367 = vmatpush.msra.mxu0 %v58
  %1368 = vmatpush.msra.mxu0 %v56
  %1369 = vmatpush.msra.mxu0 %v54
  %1370 = vmatpush.msra.mxu0 %v52
  %1371 = vmatpush.msra.mxu0 %v50
  %1372 = vmatpush.msra.mxu0 %v48
  %1373 = vmatpush.msra.mxu0 %v46
  %1374 = vmatpush.msra.mxu0 %v44
  %1375 = vmatpush.msra.mxu0 %v42
  %1376 = vmatpush.msra.mxu0 %v40
  %1377 = vmatpush.msra.mxu0 %v38
  %1378 = vmatpush.msra.mxu0 %v36
  %1379 = vmatpush.msra.mxu0 %v34
  %1380 = vmatpush.msra.mxu0 %v32
  %1381 = vmatpush.msra.mxu0 %v30
  %1382 = vmatpush.msra.mxu0 %v28
  %1383 = vmatmul.f32.gmra.mxu0 %v1359
  %v1384 = vpop.f32.mrf.mxu0
  %v1385 = vadd.f32 0.0, %v1384
  %1386 = vdwg.mxu0
  %1387 = vmatpush.msra.mxu0 %v90
  %1388 = vmatpush.msra.mxu0 %v88
  %1389 = vmatpush.msra.mxu0 %v86
  %1390 = vmatpush.msra.mxu0 %v84
  %1391 = vmatpush.msra.mxu0 %v82
  %1392 = vmatpush.msra.mxu0 %v80
  %1393 = vmatpush.msra.mxu0 %v78
  %1394 = vmatpush.msra.mxu0 %v76
  %1395 = vmatpush.msra.mxu0 %v74
  %1396 = vmatpush.msra.mxu0 %v72
  %1397 = vmatpush.msra.mxu0 %v70
  %1398 = vmatpush.msra.mxu0 %v68
  %1399 = vmatpush.msra.mxu0 %v66
  %1400 = vmatpush.msra.mxu0 %v64
  %1401 = vmatpush.msra.mxu0 %v62
  %1402 = vmatpush.msra.mxu0 %v60
  %1403 = vmatmul.f32.gmra.mxu0 %v1366
  %v1404 = vpop.f32.mrf.mxu0
  %v1405 = vadd.f32 %v1385, %v1404
  %1406 = vdwg.mxu0
  %1407 = vmatpush.msra.mxu0 %v59
  %1408 = vmatpush.msra.mxu0 %v57
  %1409 = vmatpush.msra.mxu0 %v55
  %1410 = vmatpush.msra.mxu0 %v53
  %1411 = vmatpush.msra.mxu0 %v51
  %1412 = vmatpush.msra.mxu0 %v49
  %1413 = vmatpush.msra.mxu0 %v47
  %1414 = vmatpush.msra.mxu0 %v45
  %1415 = vmatpush.msra.mxu0 %v43
  %1416 = vmatpush.msra.mxu0 %v41
  %1417 = vmatpush.msra.mxu0 %v39
  %1418 = vmatpush.msra.mxu0 %v37
  %1419 = vmatpush.msra.mxu0 %v35
  %1420 = vmatpush.msra.mxu0 %v33
  %1421 = vmatpush.msra.mxu0 %v31
  %1422 = vmatpush.msra.mxu0 %v29
  %1423 = vmatmul.f32.gmra.mxu0 %v1359
  %v1424 = vpop.f32.mrf.mxu0
  %v1425 = vadd.f32 0.0, %v1424
  %1426 = vdwg.mxu0
  %1427 = vmatpush.msra.mxu0 %v91
  %1428 = vmatpush.msra.mxu0 %v89
  %1429 = vmatpush.msra.mxu0 %v87
  %1430 = vmatpush.msra.mxu0 %v85
  %1431 = vmatpush.msra.mxu0 %v83
  %1432 = vmatpush.msra.mxu0 %v81
  %1433 = vmatpush.msra.mxu0 %v79
  %1434 = vmatpush.msra.mxu0 %v77
  %1435 = vmatpush.msra.mxu0 %v75
  %1436 = vmatpush.msra.mxu0 %v73
  %1437 = vmatpush.msra.mxu0 %v71
  %1438 = vmatpush.msra.mxu0 %v69
  %1439 = vmatpush.msra.mxu0 %v67
  %1440 = vmatpush.msra.mxu0 %v65
  %1441 = vmatpush.msra.mxu0 %v63
  %1442 = vmatpush.msra.mxu0 %v61
  %1443 = vmatmul.f32.gmra.mxu0 %v1366
  %v1444 = vpop.f32.mrf.mxu0
  %v1445 = vadd.f32 %v1425, %v1444
  %1446 = vdwg.mxu0
  %v1447 = vmul.f32 %v1405, 0.001953125
  %v1448 = vmul.f32 %v1445, 0.001953125
  %v1449 = vperm.slane %v1447, 0
  %v1450 = vperm.slane %v1448, 0
  %v1451 = vsub.f32 %v1349, %v1449
  %v1452 = vsub.f32 %v1350, %v1450
  %v1453 = vsub.f32 %v1351, %v1449
  %v1454 = vsub.f32 %v1352, %v1450
  %v1455 = vmul.f32 %v1451, %v1451
  %v1456 = vmul.f32 %v1452, %v1452
  %v1457 = vmul.f32 %v1453, %v1453
  %v1458 = vmul.f32 %v1454, %v1454
  %v1459 = vadd.f32 %v1455, %v1457
  %v1460 = vrot.slane %v1459, 4
  %v1461 = vadd.f32 %v1459, %v1460
  %v1462 = vrot.slane %v1461, 2
  %v1463 = vadd.f32 %v1461, %v1462
  %v1464 = vrot.slane %v1463, 1
  %v1465 = vadd.f32 %v1463, %v1464
  %v1466 = vadd.f32 %v1456, %v1458
  %v1467 = vrot.slane %v1466, 4
  %v1468 = vadd.f32 %v1466, %v1467
  %v1469 = vrot.slane %v1468, 2
  %v1470 = vadd.f32 %v1468, %v1469
  %v1471 = vrot.slane %v1470, 1
  %v1472 = vadd.f32 %v1470, %v1471
  %1473 = vmatpush.msra.mxu0 %v58
  %1474 = vmatpush.msra.mxu0 %v56
  %1475 = vmatpush.msra.mxu0 %v54
  %1476 = vmatpush.msra.mxu0 %v52
  %1477 = vmatpush.msra.mxu0 %v50
  %1478 = vmatpush.msra.mxu0 %v48
  %1479 = vmatpush.msra.mxu0 %v46
  %1480 = vmatpush.msra.mxu0 %v44
  %1481 = vmatpush.msra.mxu0 %v42
  %1482 = vmatpush.msra.mxu0 %v40
  %1483 = vmatpush.msra.mxu0 %v38
  %1484 = vmatpush.msra.mxu0 %v36
  %1485 = vmatpush.msra.mxu0 %v34
  %1486 = vmatpush.msra.mxu0 %v32
  %1487 = vmatpush.msra.mxu0 %v30
  %1488 = vmatpush.msra.mxu0 %v28
  %1489 = vmatmul.f32.gmra.mxu0 %v1465
  %v1490 = vpop.f32.mrf.mxu0
  %v1491 = vadd.f32 0.0, %v1490
  %1492 = vdwg.mxu0
  %1493 = vmatpush.msra.mxu0 %v90
  %1494 = vmatpush.msra.mxu0 %v88
  %1495 = vmatpush.msra.mxu0 %v86
  %1496 = vmatpush.msra.mxu0 %v84
  %1497 = vmatpush.msra.mxu0 %v82
  %1498 = vmatpush.msra.mxu0 %v80
  %1499 = vmatpush.msra.mxu0 %v78
  %1500 = vmatpush.msra.mxu0 %v76
  %1501 = vmatpush.msra.mxu0 %v74
  %1502 = vmatpush.msra.mxu0 %v72
  %1503 = vmatpush.msra.mxu0 %v70
  %1504 = vmatpush.msra.mxu0 %v68
  %1505 = vmatpush.msra.mxu0 %v66
  %1506 = vmatpush.msra.mxu0 %v64
  %1507 = vmatpush.msra.mxu0 %v62
  %1508 = vmatpush.msra.mxu0 %v60
  %1509 = vmatmul.f32.gmra.mxu0 %v1472
  %v1510 = vpop.f32.mrf.mxu0
  %v1511 = vadd.f32 %v1491, %v1510
  %1512 = vdwg.mxu0
  %1513 = vmatpush.msra.mxu0 %v59
  %1514 = vmatpush.msra.mxu0 %v57
  %1515 = vmatpush.msra.mxu0 %v55
  %1516 = vmatpush.msra.mxu0 %v53
  %1517 = vmatpush.msra.mxu0 %v51
  %1518 = vmatpush.msra.mxu0 %v49
  %1519 = vmatpush.msra.mxu0 %v47
  %1520 = vmatpush.msra.mxu0 %v45
  %1521 = vmatpush.msra.mxu0 %v43
  %1522 = vmatpush.msra.mxu0 %v41
  %1523 = vmatpush.msra.mxu0 %v39
  %1524 = vmatpush.msra.mxu0 %v37
  %1525 = vmatpush.msra.mxu0 %v35
  %1526 = vmatpush.msra.mxu0 %v33
  %1527 = vmatpush.msra.mxu0 %v31
  %1528 = vmatpush.msra.mxu0 %v29
  %1529 = vmatmul.f32.gmra.mxu0 %v1465
  %v1530 = vpop.f32.mrf.mxu0
  %v1531 = vadd.f32 0.0, %v1530
  %1532 = vdwg.mxu0
  %1533 = vmatpush.msra.mxu0 %v91
  %1534 = vmatpush.msra.mxu0 %v89
  %1535 = vmatpush.msra.mxu0 %v87
  %1536 = vmatpush.msra.mxu0 %v85
  %1537 = vmatpush.msra.mxu0 %v83
  %1538 = vmatpush.msra.mxu0 %v81
  %1539 = vmatpush.msra.mxu0 %v79
  %1540 = vmatpush.msra.mxu0 %v77
  %1541 = vmatpush.msra.mxu0 %v75
  %1542 = vmatpush.msra.mxu0 %v73
  %1543 = vmatpush.msra.mxu0 %v71
  %1544 = vmatpush.msra.mxu0 %v69
  %1545 = vmatpush.msra.mxu0 %v67
  %1546 = vmatpush.msra.mxu0 %v65
  %1547 = vmatpush.msra.mxu0 %v63
  %1548 = vmatpush.msra.mxu0 %v61
  %1549 = vmatmul.f32.gmra.mxu0 %v1472
  %v1550 = vpop.f32.mrf.mxu0
  %v1551 = vadd.f32 %v1531, %v1550
  %1552 = vdwg.mxu0
  %v1553 = vmul.f32 %v1511, 0.001953125
  %v1554 = vmul.f32 %v1551, 0.001953125
  %v1555 = vadd.f32 %v1553, 1e-05
  %v1556 = vadd.f32 %v1554, 1e-05
  %v1557 = vrsqrt.pop %v1555
  %v1558 = vmul.f32 %v1557, %v1555
  %v1559 = vmul.f32 %v1558, %v1557
  %v1560 = vmul.f32 0.5, %v1559
  %v1561 = vsub.f32 1.5, %v1560
  %v1562 = vmul.f32 %v1557, %v1561
  %vm1563 = vweird.f32 %v1555
  %vm1564 = vweird.f32 %v1557
  %vm1565 = vmor %vm1563, %vm1564
  %v1566 = vsel %vm1565, %v1557, %v1562
  %v1567 = vrsqrt.pop %v1556
  %v1568 = vmul.f32 %v1567, %v1556
  %v1569 = vmul.f32 %v1568, %v1567
  %v1570 = vmul.f32 0.5, %v1569
  %v1571 = vsub.f32 1.5, %v1570
  %v1572 = vmul.f32 %v1567, %v1571
  %vm1573 = vweird.f32 %v1556
  %vm1574 = vweird.f32 %v1567
  %vm1575 = vmor %vm1573, %vm1574
  %v1576 = vsel %vm1575, %v1567, %v1572
  %v1579 = vrot.slane %v1566, 6
  %v1580 = vrot.slane %v1576, 6
  %v1583 = vmul.f32 %v92, %v1579
  %v1584 = vmul.f32 %v93, %v1580
  %v1585 = vperm.slane %v1583, 2
  %v1586 = vperm.slane %v1584, 2
  %v1587 = vmul.f32 %v1451, %v1585
  %v1588 = vmul.f32 %v1452, %v1586
  %v1589 = vmul.f32 %v1453, %v1585
  %v1590 = vmul.f32 %v1454, %v1586
  %v1591 = vperm.slane %v92, 3
  %v1592 = vperm.slane %v93, 3
  %v1593 = vadd.f32 %v1587, %v1591
  %v1594 = vadd.f32 %v1588, %v1592
  %v1595 = vadd.f32 %v1589, %v1591
  %v1596 = vadd.f32 %v1590, %v1592
  %v1597 = vld [vmem:[%s4] sm:$0xff]
  %v1598 = vld [vmem:[%s4 + $0x8] sm:$0xff]
  %v1599 = vld [vmem:[%s4 + $0x10] sm:$0xff]
  %v1600 = vld [vmem:[%s4 + $0x18] sm:$0xff]
  %v1601 = vld [vmem:[%s4 + $0x20] sm:$0xff]
  %v1602 = vld [vmem:[%s4 + $0x28] sm:$0xff]
  %v1603 = vld [vmem:[%s4 + $0x30] sm:$0xff]
  %v1604 = vld [vmem:[%s4 + $0x38] sm:$0xff]
  %v1605 = vld [vmem:[%s4 + $0x40] sm:$0xff]
  %v1606 = vld [vmem:[%s4 + $0x48] sm:$0xff]
  %v1607 = vld [vmem:[%s4 + $0x50] sm:$0xff]
  %v1608 = vld [vmem:[%s4 + $0x58] sm:$0xff]
  %v1609 = vld [vmem:[%s4 + $0x60] sm:$0xff]
  %v1610 = vld [vmem:[%s4 + $0x68] sm:$0xff]
  %v1611 = vld [vmem:[%s4 + $0x70] sm:$0xff]
  %v1612 = vld [vmem:[%s4 + $0x78] sm:$0xff]
  %v1613 = vld [vmem:[%s4 + $0x80] sm:$0xff]
  %v1614 = vld [vmem:[%s4 + $0x88] sm:$0xff]
  %v1615 = vld [vmem:[%s4 + $0x90] sm:$0xff]
  %v1616 = vld [vmem:[%s4 + $0x98] sm:$0xff]
  %v1617 = vld [vmem:[%s4 + $0xa0] sm:$0xff]
  %v1618 = vld [vmem:[%s4 + $0xa8] sm:$0xff]
  %v1619 = vld [vmem:[%s4 + $0xb0] sm:$0xff]
  %v1620 = vld [vmem:[%s4 + $0xb8] sm:$0xff]
  %v1621 = vld [vmem:[%s4 + $0xc0] sm:$0xff]
  %v1622 = vld [vmem:[%s4 + $0xc8] sm:$0xff]
  %v1623 = vld [vmem:[%s4 + $0xd0] sm:$0xff]
  %v1624 = vld [vmem:[%s4 + $0xd8] sm:$0xff]
  %v1625 = vld [vmem:[%s4 + $0xe0] sm:$0xff]
  %v1626 = vld [vmem:[%s4 + $0xe8] sm:$0xff]
  %v1627 = vld [vmem:[%s4 + $0xf0] sm:$0xff]
  %v1628 = vld [vmem:[%s4 + $0xf8] sm:$0xff]
  %1629 = vmatpush.msra.mxu0 %v1627
  %1630 = vmatpush.msra.mxu0 %v1625
  %1631 = vmatpush.msra.mxu0 %v1623
  %1632 = vmatpush.msra.mxu0 %v1621
  %1633 = vmatpush.msra.mxu0 %v1619
  %1634 = vmatpush.msra.mxu0 %v1617
  %1635 = vmatpush.msra.mxu0 %v1615
  %1636 = vmatpush.msra.mxu0 %v1613
  %1637 = vmatpush.msra.mxu0 %v1611
  %1638 = vmatpush.msra.mxu0 %v1609
  %1639 = vmatpush.msra.mxu0 %v1607
  %1640 = vmatpush.msra.mxu0 %v1605
  %1641 = vmatpush.msra.mxu0 %v1603
  %1642 = vmatpush.msra.mxu0 %v1601
  %1643 = vmatpush.msra.mxu0 %v1599
  %1644 = vmatpush.msra.mxu0 %v1597
  %1645 = vmatmul.f32.gmra.mxu0 %v26
  %v1646 = vpop.f32.mrf.mxu0
  %v1647 = vadd.f32 0.0, %v1646
  %1648 = vmatmul.f32.gmra.mxu0 %v27
  %v1649 = vpop.f32.mrf.mxu0
  %v1650 = vadd.f32 0.0, %v1649
  %1651 = vdwg.mxu0
  %1652 = vmatpush.msra.mxu0 %v1628
  %1653 = vmatpush.msra.mxu0 %v1626
  %1654 = vmatpush.msra.mxu0 %v1624
  %1655 = vmatpush.msra.mxu0 %v1622
  %1656 = vmatpush.msra.mxu0 %v1620
  %1657 = vmatpush.msra.mxu0 %v1618
  %1658 = vmatpush.msra.mxu0 %v1616
  %1659 = vmatpush.msra.mxu0 %v1614
  %1660 = vmatpush.msra.mxu0 %v1612
  %1661 = vmatpush.msra.mxu0 %v1610
  %1662 = vmatpush.msra.mxu0 %v1608
  %1663 = vmatpush.msra.mxu0 %v1606
  %1664 = vmatpush.msra.mxu0 %v1604
  %1665 = vmatpush.msra.mxu0 %v1602
  %1666 = vmatpush.msra.mxu0 %v1600
  %1667 = vmatpush.msra.mxu0 %v1598
  %1668 = vmatmul.f32.gmra.mxu0 %v26
  %v1669 = vpop.f32.mrf.mxu0
  %v1670 = vadd.f32 0.0, %v1669
  %1671 = vmatmul.f32.gmra.mxu0 %v27
  %v1672 = vpop.f32.mrf.mxu0
  %v1673 = vadd.f32 0.0, %v1672
  %1674 = vdwg.mxu0
  %v1675 = vadd.f32 %v1647, %v1650
  %v1676 = vrot.slane %v1675, 4
  %v1677 = vadd.f32 %v1675, %v1676
  %v1678 = vrot.slane %v1677, 2
  %v1679 = vadd.f32 %v1677, %v1678
  %v1680 = vrot.slane %v1679, 1
  %v1681 = vadd.f32 %v1679, %v1680
  %v1682 = vadd.f32 %v1670, %v1673
  %v1683 = vrot.slane %v1682, 4
  %v1684 = vadd.f32 %v1682, %v1683
  %v1685 = vrot.slane %v1684, 2
  %v1686 = vadd.f32 %v1684, %v1685
  %v1687 = vrot.slane %v1686, 1
  %v1688 = vadd.f32 %v1686, %v1687
  %1689 = vmatpush.msra.mxu0 %v58
  %1690 = vmatpush.msra.mxu0 %v56
  %1691 = vmatpush.msra.mxu0 %v54
  %1692 = vmatpush.msra.mxu0 %v52
  %1693 = vmatpush.msra.mxu0 %v50
  %1694 = vmatpush.msra.mxu0 %v48
  %1695 = vmatpush.msra.mxu0 %v46
  %1696 = vmatpush.msra.mxu0 %v44
  %1697 = vmatpush.msra.mxu0 %v42
  %1698 = vmatpush.msra.mxu0 %v40
  %1699 = vmatpush.msra.mxu0 %v38
  %1700 = vmatpush.msra.mxu0 %v36
  %1701 = vmatpush.msra.mxu0 %v34
  %1702 = vmatpush.msra.mxu0 %v32
  %1703 = vmatpush.msra.mxu0 %v30
  %1704 = vmatpush.msra.mxu0 %v28
  %1705 = vmatmul.f32.gmra.mxu0 %v1681
  %v1706 = vpop.f32.mrf.mxu0
  %v1707 = vadd.f32 0.0, %v1706
  %1708 = vdwg.mxu0
  %1709 = vmatpush.msra.mxu0 %v90
  %1710 = vmatpush.msra.mxu0 %v88
  %1711 = vmatpush.msra.mxu0 %v86
  %1712 = vmatpush.msra.mxu0 %v84
  %1713 = vmatpush.msra.mxu0 %v82
  %1714 = vmatpush.msra.mxu0 %v80
  %1715 = vmatpush.msra.mxu0 %v78
  %1716 = vmatpush.msra.mxu0 %v76
  %1717 = vmatpush.msra.mxu0 %v74
  %1718 = vmatpush.msra.mxu0 %v72
  %1719 = vmatpush.msra.mxu0 %v70
  %1720 = vmatpush.msra.mxu0 %v68
  %1721 = vmatpush.msra.mxu0 %v66
  %1722 = vmatpush.msra.mxu0 %v64
  %1723 = vmatpush.msra.mxu0 %v62
  %1724 = vmatpush.msra.mxu0 %v60
  %1725 = vmatmul.f32.gmra.mxu0 %v1688
  %v1726 = vpop.f32.mrf.mxu0
  %v1727 = vadd.f32 %v1707, %v1726
  %1728 = vdwg.mxu0
  %1729 = vmatpush.msra.mxu0 %v59
  %1730 = vmatpush.msra.mxu0 %v57
  %1731 = vmatpush.msra.mxu0 %v55
  %1732 = vmatpush.msra.mxu0 %v53
  %1733 = vmatpush.msra.mxu0 %v51
  %1734 = vmatpush.msra.mxu0 %v49
  %1735 = vmatpush.msra.mxu0 %v47
  %1736 = vmatpush.msra.mxu0 %v45
  %1737 = vmatpush.msra.mxu0 %v43
  %1738 = vmatpush.msra.mxu0 %v41
  %1739 = vmatpush.msra.mxu0 %v39
  %1740 = vmatpush.msra.mxu0 %v37
  %1741 = vmatpush.msra.mxu0 %v35
  %1742 = vmatpush.msra.mxu0 %v33
  %1743 = vmatpush.msra.mxu0 %v31
  %1744 = vmatpush.msra.mxu0 %v29
  %1745 = vmatmul.f32.gmra.mxu0 %v1681
  %v1746 = vpop.f32.mrf.mxu0
  %v1747 = vadd.f32 0.0, %v1746
  %1748 = vdwg.mxu0
  %1749 = vmatpush.msra.mxu0 %v91
  %1750 = vmatpush.msra.mxu0 %v89
  %1751 = vmatpush.msra.mxu0 %v87
  %1752 = vmatpush.msra.mxu0 %v85
  %1753 = vmatpush.msra.mxu0 %v83
  %1754 = vmatpush.msra.mxu0 %v81
  %1755 = vmatpush.msra.mxu0 %v79
  %1756 = vmatpush.msra.mxu0 %v77
  %1757 = vmatpush.msra.mxu0 %v75
  %1758 = vmatpush.msra.mxu0 %v73
  %1759 = vmatpush.msra.mxu0 %v71
  %1760 = vmatpush.msra.mxu0 %v69
  %1761 = vmatpush.msra.mxu0 %v67
  %1762 = vmatpush.msra.mxu0 %v65
  %1763 = vmatpush.msra.mxu0 %v63
  %1764 = vmatpush.msra.mxu0 %v61
  %1765 = vmatmul.f32.gmra.mxu0 %v1688
  %v1766 = vpop.f32.mrf.mxu0
  %v1767 = vadd.f32 %v1747, %v1766
  %1768 = vdwg.mxu0
  %v1769 = vmul.f32 %v1727, 0.001953125
  %v1770 = vmul.f32 %v1767, 0.001953125
  %v1771 = vperm.slane %v1769, 0
  %v1772 = vperm.slane %v1770, 0
  %v1773 = vsub.f32 %v1647, %v1771
  %v1774 = vsub.f32 %v1670, %v1772
  %v1775 = vsub.f32 %v1650, %v1771
  %v1776 = vsub.f32 %v1673, %v1772
  %v1777 = vmul.f32 %v1773, %v1773
  %v1778 = vmul.f32 %v1774, %v1774
  %v1779 = vmul.f32 %v1775, %v1775
  %v1780 = vmul.f32 %v1776, %v1776
  %v1781 = vadd.f32 %v1777, %v1779
  %v1782 = vrot.slane %v1781, 4
  %v1783 = vadd.f32 %v1781, %v1782
  %v1784 = vrot.slane %v1783, 2
  %v1785 = vadd.f32 %v1783, %v1784
  %v1786 = vrot.slane %v1785, 1
  %v1787 = vadd.f32 %v1785, %v1786
  %v1788 = vadd.f32 %v1778, %v1780
  %v1789 = vrot.slane %v1788, 4
  %v1790 = vadd.f32 %v1788, %v1789
  %v1791 = vrot.slane %v1790, 2
  %v1792 = vadd.f32 %v1790, %v1791
  %v1793 = vrot.slane %v1792, 1
  %v1794 = vadd.f32 %v1792, %v1793
  %1795 = vmatpush.msra.mxu0 %v58
  %1796 = vmatpush.msra.mxu0 %v56
  %1797 = vmatpush.msra.mxu0 %v54
  %1798 = vmatpush.msra.mxu0 %v52
  %1799 = vmatpush.msra.mxu0 %v50
  %1800 = vmatpush.msra.mxu0 %v48
  %1801 = vmatpush.msra.mxu0 %v46
  %1802 = vmatpush.msra.mxu0 %v44
  %1803 = vmatpush.msra.mxu0 %v42
  %1804 = vmatpush.msra.mxu0 %v40
  %1805 = vmatpush.msra.mxu0 %v38
  %1806 = vmatpush.msra.mxu0 %v36
  %1807 = vmatpush.msra.mxu0 %v34
  %1808 = vmatpush.msra.mxu0 %v32
  %1809 = vmatpush.msra.mxu0 %v30
  %1810 = vmatpush.msra.mxu0 %v28
  %1811 = vmatmul.f32.gmra.mxu0 %v1787
  %v1812 = vpop.f32.mrf.mxu0
  %v1813 = vadd.f32 0.0, %v1812
  %1814 = vdwg.mxu0
  %1815 = vmatpush.msra.mxu0 %v90
  %1816 = vmatpush.msra.mxu0 %v88
  %1817 = vmatpush.msra.mxu0 %v86
  %1818 = vmatpush.msra.mxu0 %v84
  %1819 = vmatpush.msra.mxu0 %v82
  %1820 = vmatpush.msra.mxu0 %v80
  %1821 = vmatpush.msra.mxu0 %v78
  %1822 = vmatpush.msra.mxu0 %v76
  %1823 = vmatpush.msra.mxu0 %v74
  %1824 = vmatpush.msra.mxu0 %v72
  %1825 = vmatpush.msra.mxu0 %v70
  %1826 = vmatpush.msra.mxu0 %v68
  %1827 = vmatpush.msra.mxu0 %v66
  %1828 = vmatpush.msra.mxu0 %v64
  %1829 = vmatpush.msra.mxu0 %v62
  %1830 = vmatpush.msra.mxu0 %v60
  %1831 = vmatmul.f32.gmra.mxu0 %v1794
  %v1832 = vpop.f32.mrf.mxu0
  %v1833 = vadd.f32 %v1813, %v1832
  %1834 = vdwg.mxu0
  %1835 = vmatpush.msra.mxu0 %v59
  %1836 = vmatpush.msra.mxu0 %v57
  %1837 = vmatpush.msra.mxu0 %v55
  %1838 = vmatpush.msra.mxu0 %v53
  %1839 = vmatpush.msra.mxu0 %v51
  %1840 = vmatpush.msra.mxu0 %v49
  %1841 = vmatpush.msra.mxu0 %v47
  %1842 = vmatpush.msra.mxu0 %v45
  %1843 = vmatpush.msra.mxu0 %v43
  %1844 = vmatpush.msra.mxu0 %v41
  %1845 = vmatpush.msra.mxu0 %v39
  %1846 = vmatpush.msra.mxu0 %v37
  %1847 = vmatpush.msra.mxu0 %v35
  %1848 = vmatpush.msra.mxu0 %v33
  %1849 = vmatpush.msra.mxu0 %v31
  %1850 = vmatpush.msra.mxu0 %v29
  %1851 = vmatmul.f32.gmra.mxu0 %v1787
  %v1852 = vpop.f32.mrf.mxu0
  %v1853 = vadd.f32 0.0, %v1852
  %1854 = vdwg.mxu0
  %1855 = vmatpush.msra.mxu0 %v91
  %1856 = vmatpush.msra.mxu0 %v89
  %1857 = vmatpush.msra.mxu0 %v87
  %1858 = vmatpush.msra.mxu0 %v85
  %1859 = vmatpush.msra.mxu0 %v83
  %1860 = vmatpush.msra.mxu0 %v81
  %1861 = vmatpush.msra.mxu0 %v79
  %1862 = vmatpush.msra.mxu0 %v77
  %1863 = vmatpush.msra.mxu0 %v75
  %1864 = vmatpush.msra.mxu0 %v73
  %1865 = vmatpush.msra.mxu0 %v71
  %1866 = vmatpush.msra.mxu0 %v69
  %1867 = vmatpush.msra.mxu0 %v67
  %1868 = vmatpush.msra.mxu0 %v65
  %1869 = vmatpush.msra.mxu0 %v63
  %1870 = vmatpush.msra.mxu0 %v61
  %1871 = vmatmul.f32.gmra.mxu0 %v1794
  %v1872 = vpop.f32.mrf.mxu0
  %v1873 = vadd.f32 %v1853, %v1872
  %1874 = vdwg.mxu0
  %v1875 = vmul.f32 %v1833, 0.001953125
  %v1876 = vmul.f32 %v1873, 0.001953125
  %v1877 = vadd.f32 %v1875, 1e-05
  %v1878 = vadd.f32 %v1876, 1e-05
  %v1879 = vrsqrt.pop %v1877
  %v1880 = vmul.f32 %v1879, %v1877
  %v1881 = vmul.f32 %v1880, %v1879
  %v1882 = vmul.f32 0.5, %v1881
  %v1883 = vsub.f32 1.5, %v1882
  %v1884 = vmul.f32 %v1879, %v1883
  %vm1885 = vweird.f32 %v1877
  %vm1886 = vweird.f32 %v1879
  %vm1887 = vmor %vm1885, %vm1886
  %v1888 = vsel %vm1887, %v1879, %v1884
  %v1889 = vrsqrt.pop %v1878
  %v1890 = vmul.f32 %v1889, %v1878
  %v1891 = vmul.f32 %v1890, %v1889
  %v1892 = vmul.f32 0.5, %v1891
  %v1893 = vsub.f32 1.5, %v1892
  %v1894 = vmul.f32 %v1889, %v1893
  %vm1895 = vweird.f32 %v1878
  %vm1896 = vweird.f32 %v1889
  %vm1897 = vmor %vm1895, %vm1896
  %v1898 = vsel %vm1897, %v1889, %v1894
  %v1901 = vrot.slane %v1888, 4
  %v1902 = vrot.slane %v1898, 4
  %v1905 = vmul.f32 %v92, %v1901
  %v1906 = vmul.f32 %v93, %v1902
  %v1907 = vperm.slane %v1905, 4
  %v1908 = vperm.slane %v1906, 4
  %v1909 = vmul.f32 %v1773, %v1907
  %v1910 = vmul.f32 %v1774, %v1908
  %v1911 = vmul.f32 %v1775, %v1907
  %v1912 = vmul.f32 %v1776, %v1908
  %v1913 = vperm.slane %v92, 5
  %v1914 = vperm.slane %v93, 5
  %v1915 = vadd.f32 %v1909, %v1913
  %v1916 = vadd.f32 %v1910, %v1914
  %v1917 = vadd.f32 %v1911, %v1913
  %v1918 = vadd.f32 %v1912, %v1914
  %v1919 = vadd.f32 %v1593, %v1915
  %v1920 = vadd.f32 %v1594, %v1916
  %v1921 = vadd.f32 %v1595, %v1917
  %v1922 = vadd.f32 %v1596, %v1918
  %v1923 = vmax.f32 %v1919, 0.0
  %v1924 = vmax.f32 %v1920, 0.0
  %v1925 = vmax.f32 %v1921, 0.0
  %v1926 = vmax.f32 %v1922, 0.0
  %1927 = vst [vmem:[%s7] sm:$0xff] %v1923
  %1928 = vst [vmem:[%s7 + $0x8] sm:$0xff] %v1924
  %1929 = vst [vmem:[%s7 + $0x10] sm:$0xff] %v1925
  %1930 = vst [vmem:[%s7 + $0x18] sm:$0xff] %v1926
  // Predicated region
  $region30: #{residual_forward.1} parent=0 // pred_check
    _
  $region31: #{residual_forward.1} parent=0 // pred_check_branch
    %1932 = sbr.rel (0) target = $region33
  $region32: #{residual_forward.1} parent=0 // pred_region
    _
  $region33: #{residual_forward.1} parent=0 // pred_fallthru
    _
  // Predicated region
  $region34: #{residual_forward.1} parent=0 // pred_check
    _
  $region35: #{residual_forward.1} parent=0 // pred_check_branch
    %1934 = sbr.rel (0) target = $region37
  $region36: #{residual_forward.1} parent=0 // pred_region
    _
  $region37: #{residual_forward.1} parent=0 // pred_fallthru
    _

</llo_original>
